<compile_context>
chip_gen: v7x
topology: tpu7x:2x2x1
jax: 0.10.0
libtpu: 0.0.40
codegen_flags: <defaults>
</compile_context>

<pallas_src>
import functools

import jax
import jax.numpy as jnp
from jax import lax
from jax.experimental import pallas as pl
from jax.experimental.pallas import tpu as pltpu


# ----------------------------- helpers (traced inside kernels) ----------------

def _layernorm(x, g, b, eps=1e-12):
    mu = jnp.mean(x, axis=-1, keepdims=True)
    var = jnp.mean((x - mu) ** 2, axis=-1, keepdims=True)
    return (x - mu) * jax.lax.rsqrt(var + eps) * g + b


def _softmax(x):
    m = jnp.max(x, axis=-1, keepdims=True)
    e = jnp.exp(x - m)
    return e / jnp.sum(e, axis=-1, keepdims=True)


# ----------------------------- fused Pallas kernel -----------------------------

def text_encoder_kernel(seed_ref,                       # scalar-prefetch (SMEM)
                        x_ref, mask_ref,                # per-sequence blocks
                        ln0g_ref, ln0b_ref,
                        wq_ref, bq_ref, wk_ref, bk_ref, wv_ref, bv_ref,
                        wo_ref, bo_ref,
                        ln1g_ref, ln1b_ref,
                        w1_ref, b1_ref, w2_ref, b2_ref,
                        ln2g_ref, ln2b_ref,
                        wp_ref, bp_ref,
                        o_ref, *, num_heads, drop_p, training):
    bf16 = jnp.bfloat16
    f32 = jnp.float32

    x = x_ref[0].astype(f32)          # (S, H)
    mask_bias = mask_ref[0]           # (1, S) additive bias over key positions
    S, H = x.shape
    NH = num_heads

    # embedding layernorm (BERT applies LN after embeddings)
    x = _layernorm(x, ln0g_ref[...], ln0b_ref[...])
    x_bf = x.astype(bf16)
    x_bc = jnp.broadcast_to(x_bf[None], (NH, S, H))     # hoisted once

    # per-head projections, head-batched (wq/bq already pre-scaled by 1/sqrt(dh))
    q = jnp.einsum('nsh,nhd->nsd', x_bc, wq_ref[...],
                   preferred_element_type=f32) + bq_ref[...]     # (NH,S,dh)
    k = jnp.einsum('nsh,nhd->nsd', x_bc, wk_ref[...],
                   preferred_element_type=f32) + bk_ref[...]
    v = jnp.einsum('nsh,nhd->nsd', x_bc, wv_ref[...],
                   preferred_element_type=f32) + bv_ref[...]

    # attention, batched over heads (single leading batch dim)
    s = jnp.einsum('nqd,nkd->nqk', q.astype(bf16), k.astype(bf16),
                   preferred_element_type=f32)                   # (NH,S,S)
    s = s + mask_bias                                            # mask applied once
    p = _softmax(s)
    ctx = jnp.einsum('nqk,nkd->nqd', p.astype(bf16), v.astype(bf16),
                     preferred_element_type=f32)                 # (NH,S,dh)

    # output projection: per-head partials then reduce over heads
    attn = jnp.einsum('nqd,ndh->nqh', ctx.astype(bf16), wo_ref[...],
                      preferred_element_type=f32)                # (NH,S,H)
    attn_out = jnp.sum(attn, axis=0) + bo_ref[...]               # (S,H)

    h1 = _layernorm(x + attn_out, ln1g_ref[...], ln1b_ref[...])

    # feed-forward
    ff = jnp.dot(h1.astype(bf16), w1_ref[...],
                 preferred_element_type=f32) + b1_ref[...]
    # TODO(synk): HF BERT default activation is exact (erf) GELU; tanh approx used here.
    ff = jax.nn.gelu(ff, approximate=True)
    ff = jnp.dot(ff.astype(bf16), w2_ref[...],
                 preferred_element_type=f32) + b2_ref[...]
    h2 = _layernorm(h1 + ff, ln2g_ref[...], ln2b_ref[...])

    # common_projection (fused) -> (S, D)
    y = jnp.dot(h2.astype(bf16), wp_ref[...],
                preferred_element_type=f32) + bp_ref[...]

    # inverted dropout (training mode), portable hash-based PRNG keyed on the
    # global element index -> independent of grid blocking, runs on TPU and
    # under interpret mode (no pltpu.prng_* primitives needed).
    if training and drop_p > 0.0:
        D = y.shape[-1]
        row0 = pl.program_id(0) * S
        ridx = (lax.broadcasted_iota(jnp.int32, y.shape, 0) + row0).astype(jnp.uint32)
        cidx = lax.broadcasted_iota(jnp.int32, y.shape, 1).astype(jnp.uint32)
        seed_u = seed_ref[0].astype(jnp.uint32)
        h = (ridx * jnp.uint32(D) + cidx) ^ (seed_u * jnp.uint32(0x9E3779B9))
        h = h * jnp.uint32(0x85EBCA6B)
        h = h ^ (h >> 13)
        h = h * jnp.uint32(0xC2B2AE35)
        h = h ^ (h >> 16)
        u = (h >> 8).astype(f32) * f32(1.0 / (1 << 24))          # uniform [0,1)
        keep = u >= f32(drop_p)
        y = jnp.where(keep, y * (1.0 / (1.0 - drop_p)), 0.0)

    o_ref[0] = y.astype(o_ref.dtype)


# ----------------------------- wrapper -----------------------------------------

def text_encoder_forward(input_ids, attention_mask, params, *,
                         num_heads, drop_p=0.2, training=True, seed=0):
    B, S = input_ids.shape
    H = params["tok_emb"].shape[1]
    D = params["w_proj"].shape[1]
    NH = num_heads
    dh = H // NH
    scale = 1.0 / float(dh) ** 0.5
    bf16 = jnp.bfloat16

    # glue: embedding lookup + positional embeddings + additive attention mask
    # TODO(synk): the gather could be moved in-kernel via scalar-prefetched ids
    # + row-gather BlockSpec to save one [B,S,H] HBM round trip.
    x = params["tok_emb"][input_ids] + params["pos_emb"][None, :S, :]            # (B,S,H)
    mask_bias = (1.0 - attention_mask.astype(jnp.float32))[:, None, :] * (-1e9)   # (B,1,S)

    # reshape weights to head-batched layouts (free, done once in XLA);
    # fold 1/sqrt(dh) into Q weight+bias; store matmul weights as bf16.
    wqkv = params["w_qkv"]                    # (H, 3H)
    bqkv = params["b_qkv"][0]                 # (3H,)

    def head_split(w):                        # (H, H) -> (NH, H, dh)
        return w.reshape(H, NH, dh).transpose(1, 0, 2)

    weights = [
        params["ln0_g"], params["ln0_b"],
        (head_split(wqkv[:, 0:H]) * scale).astype(bf16),
        (bqkv[0:H].reshape(NH, 1, dh) * scale).astype(jnp.float32),
        head_split(wqkv[:, H:2 * H]).astype(bf16),
        bqkv[H:2 * H].reshape(NH, 1, dh).astype(jnp.float32),
        head_split(wqkv[:, 2 * H:3 * H]).astype(bf16),
        bqkv[2 * H:3 * H].reshape(NH, 1, dh).astype(jnp.float32),
        params["w_o"].reshape(NH, dh, H).astype(bf16),
        params["b_o"],
        params["ln1_g"], params["ln1_b"],
        params["w_ff1"].astype(bf16), params["b_ff1"],
        params["w_ff2"].astype(bf16), params["b_ff2"],
        params["ln2_g"], params["ln2_b"],
        params["w_proj"].astype(bf16), params["b_proj"],
    ]

    def const_spec(w):
        nd = w.ndim
        return pl.BlockSpec(w.shape, lambda b, sd: (0,) * nd)   # grid-invariant

    weight_specs = [const_spec(w) for w in weights]
    seed_arr = jnp.array([seed], dtype=jnp.int32)

    out = pl.pallas_call(
        functools.partial(text_encoder_kernel, num_heads=NH,
                          drop_p=drop_p, training=training),
        out_shape=jax.ShapeDtypeStruct((B, S, D), jnp.float32),
        grid_spec=pltpu.PrefetchScalarGridSpec(
            num_scalar_prefetch=1,                 # seed lands in SMEM
            grid=(B,),
            in_specs=[pl.BlockSpec((1, S, H), lambda b, sd: (b, 0, 0)),
                      pl.BlockSpec((1, 1, S), lambda b, sd: (b, 0, 0))] + weight_specs,
            out_specs=pl.BlockSpec((1, S, D), lambda b, sd: (b, 0, 0)),
        ),
        compiler_params=pltpu.CompilerParams(
            dimension_semantics=("parallel",),      # megacore sharding on v7x
            vmem_limit_bytes=32 * 1024 * 1024,
        ),
    )(seed_arr, x, mask_bias, *weights)

    return out


# ----------------------------- parameter init ----------------------------------

def init_params(key, *, vocab, max_seq, hidden, ffn, model_dim):
    ks = jax.random.split(key, 8)
    std = 0.02
    return {
        "tok_emb": jax.random.normal(ks[0], (vocab, hidden), jnp.float32) * std,
        "pos_emb": jax.random.normal(ks[1], (max_seq, hidden), jnp.float32) * std,
        "ln0_g": jnp.ones((1, hidden), jnp.float32),
        "ln0_b": jnp.zeros((1, hidden), jnp.float32),
        "w_qkv": jax.random.normal(ks[2], (hidden, 3 * hidden), jnp.float32) * std,
        "b_qkv": jnp.zeros((1, 3 * hidden), jnp.float32),
        "w_o": jax.random.normal(ks[3], (hidden, hidden), jnp.float32) * std,
        "b_o": jnp.zeros((1, hidden), jnp.float32),
        "ln1_g": jnp.ones((1, hidden), jnp.float32),
        "ln1_b": jnp.zeros((1, hidden), jnp.float32),
        "w_ff1": jax.random.normal(ks[4], (hidden, ffn), jnp.float32) * std,
        "b_ff1": jnp.zeros((1, ffn), jnp.float32),
        "w_ff2": jax.random.normal(ks[5], (ffn, hidden), jnp.float32) * std,
        "b_ff2": jnp.zeros((1, hidden), jnp.float32),
        "ln2_g": jnp.ones((1, hidden), jnp.float32),
        "ln2_b": jnp.zeros((1, hidden), jnp.float32),
        "w_proj": jax.random.normal(ks[6], (hidden, model_dim), jnp.float32) * std,
        "b_proj": jnp.zeros((1, model_dim), jnp.float32),
    }


if __name__ == "__main__":
    B, S, H, NH, F, D, VOCAB = 2, 8, 32, 4, 64, 16, 100

    key = jax.random.PRNGKey(0)
    k_params, k_ids = jax.random.split(key)
    params = init_params(k_params, vocab=VOCAB, max_seq=S, hidden=H, ffn=F, model_dim=D)

    input_ids = jax.random.randint(k_ids, (B, S), 0, VOCAB, dtype=jnp.int32)
    attention_mask = jnp.array([[1, 1, 1, 1, 1, 1, 0, 0],
                                [1, 1, 1, 1, 1, 1, 1, 1]], dtype=jnp.int32)

    out = text_encoder_forward(input_ids, attention_mask, params,
                               num_heads=NH, drop_p=0.2, training=True, seed=0)
    out = jax.block_until_ready(out)

    assert out.shape == (B, S, D), out.shape
    assert out.dtype == jnp.float32
    assert bool(jnp.all(jnp.isfinite(out)))
    print("KERNEL_OK")
</pallas_src>

<mosaic_0001>
module attributes {stable_mosaic.version = 11 : i64} {
  func.func @text_encoder_kernel(%arg0: i32, %arg1: memref<1xi32, #tpu.memory_space<smem>>, %arg2: memref<1x8x32xf32, #tpu.memory_space<vmem>>, %arg3: memref<1x1x8xf32, #tpu.memory_space<vmem>>, %arg4: memref<1x32xf32, #tpu.memory_space<vmem>>, %arg5: memref<1x32xf32, #tpu.memory_space<vmem>>, %arg6: memref<4x32x8xbf16, #tpu.memory_space<vmem>>, %arg7: memref<4x1x8xf32, #tpu.memory_space<vmem>>, %arg8: memref<4x32x8xbf16, #tpu.memory_space<vmem>>, %arg9: memref<4x1x8xf32, #tpu.memory_space<vmem>>, %arg10: memref<4x32x8xbf16, #tpu.memory_space<vmem>>, %arg11: memref<4x1x8xf32, #tpu.memory_space<vmem>>, %arg12: memref<4x8x32xbf16, #tpu.memory_space<vmem>>, %arg13: memref<1x32xf32, #tpu.memory_space<vmem>>, %arg14: memref<1x32xf32, #tpu.memory_space<vmem>>, %arg15: memref<1x32xf32, #tpu.memory_space<vmem>>, %arg16: memref<32x64xbf16, #tpu.memory_space<vmem>>, %arg17: memref<1x64xf32, #tpu.memory_space<vmem>>, %arg18: memref<64x32xbf16, #tpu.memory_space<vmem>>, %arg19: memref<1x32xf32, #tpu.memory_space<vmem>>, %arg20: memref<1x32xf32, #tpu.memory_space<vmem>>, %arg21: memref<1x32xf32, #tpu.memory_space<vmem>>, %arg22: memref<32x16xbf16, #tpu.memory_space<vmem>>, %arg23: memref<1x16xf32, #tpu.memory_space<vmem>>, %arg24: memref<1x8x16xf32, #tpu.memory_space<vmem>>) attributes {dimension_semantics = [#tpu.dimension_semantics<parallel>], iteration_bounds = array<i64: 2>, scalar_prefetch = 1 : i64, scratch_operands = 0 : i64, tpu.core_type = #tpu.core_type<tc>, window_params = [{transform_indices = @transform_0, window_bounds = array<i64: 1, 8, 32>}, {transform_indices = @transform_1, window_bounds = array<i64: 1, 1, 8>}, {pipeline_mode = #tpu.pipeline_mode<synchronous>, transform_indices = @transform_2, window_bounds = array<i64: 1, 32>}, {pipeline_mode = #tpu.pipeline_mode<synchronous>, transform_indices = @transform_3, window_bounds = array<i64: 1, 32>}, {pipeline_mode = #tpu.pipeline_mode<synchronous>, transform_indices = @transform_4, window_bounds = array<i64: 4, 32, 8>}, {pipeline_mode = #tpu.pipeline_mode<synchronous>, transform_indices = @transform_5, window_bounds = array<i64: 4, 1, 8>}, {pipeline_mode = #tpu.pipeline_mode<synchronous>, transform_indices = @transform_6, window_bounds = array<i64: 4, 32, 8>}, {pipeline_mode = #tpu.pipeline_mode<synchronous>, transform_indices = @transform_7, window_bounds = array<i64: 4, 1, 8>}, {pipeline_mode = #tpu.pipeline_mode<synchronous>, transform_indices = @transform_8, window_bounds = array<i64: 4, 32, 8>}, {pipeline_mode = #tpu.pipeline_mode<synchronous>, transform_indices = @transform_9, window_bounds = array<i64: 4, 1, 8>}, {pipeline_mode = #tpu.pipeline_mode<synchronous>, transform_indices = @transform_10, window_bounds = array<i64: 4, 8, 32>}, {pipeline_mode = #tpu.pipeline_mode<synchronous>, transform_indices = @transform_11, window_bounds = array<i64: 1, 32>}, {pipeline_mode = #tpu.pipeline_mode<synchronous>, transform_indices = @transform_12, window_bounds = array<i64: 1, 32>}, {pipeline_mode = #tpu.pipeline_mode<synchronous>, transform_indices = @transform_13, window_bounds = array<i64: 1, 32>}, {pipeline_mode = #tpu.pipeline_mode<synchronous>, transform_indices = @transform_14, window_bounds = array<i64: 32, 64>}, {pipeline_mode = #tpu.pipeline_mode<synchronous>, transform_indices = @transform_15, window_bounds = array<i64: 1, 64>}, {pipeline_mode = #tpu.pipeline_mode<synchronous>, transform_indices = @transform_16, window_bounds = array<i64: 64, 32>}, {pipeline_mode = #tpu.pipeline_mode<synchronous>, transform_indices = @transform_17, window_bounds = array<i64: 1, 32>}, {pipeline_mode = #tpu.pipeline_mode<synchronous>, transform_indices = @transform_18, window_bounds = array<i64: 1, 32>}, {pipeline_mode = #tpu.pipeline_mode<synchronous>, transform_indices = @transform_19, window_bounds = array<i64: 1, 32>}, {pipeline_mode = #tpu.pipeline_mode<synchronous>, transform_indices = @transform_20, window_bounds = array<i64: 32, 16>}, {pipeline_mode = #tpu.pipeline_mode<synchronous>, transform_indices = @transform_21, window_bounds = array<i64: 1, 16>}, {transform_indices = @transform_22, window_bounds = array<i64: 1, 8, 16>}]} {
    %c0 = arith.constant 0 : index
    %c0_0 = arith.constant 0 : index
    %c0_1 = arith.constant 0 : index
    %0 = vector.load %arg2[%c0, %c0_0, %c0_1] : memref<1x8x32xf32, #tpu.memory_space<vmem>>, vector<1x8x32xf32>
    %1 = vector.shape_cast %0 : vector<1x8x32xf32> to vector<8x32xf32>
    %c0_2 = arith.constant 0 : index
    %c0_3 = arith.constant 0 : index
    %c0_4 = arith.constant 0 : index
    %2 = vector.load %arg3[%c0_2, %c0_3, %c0_4] : memref<1x1x8xf32, #tpu.memory_space<vmem>>, vector<1x1x8xf32>
    %3 = vector.shape_cast %2 : vector<1x1x8xf32> to vector<1x8xf32>
    %c0_5 = arith.constant 0 : index
    %c0_6 = arith.constant 0 : index
    %4 = vector.load %arg4[%c0_5, %c0_6] : memref<1x32xf32, #tpu.memory_space<vmem>>, vector<1x32xf32>
    %c0_7 = arith.constant 0 : index
    %c0_8 = arith.constant 0 : index
    %5 = vector.load %arg5[%c0_7, %c0_8] : memref<1x32xf32, #tpu.memory_space<vmem>>, vector<1x32xf32>
    %cst = arith.constant dense<0.000000e+00> : vector<8xf32>
    %6 = vector.multi_reduction <add>, %1, %cst [1] : vector<8x32xf32> to vector<8xf32>
    %7 = vector.shape_cast %6 : vector<8xf32> to vector<8x1xf32>
    %cst_9 = arith.constant 3.200000e+01 : f32
    %8 = vector.broadcast %cst_9 : f32 to vector<8x1xf32>
    %9 = arith.divf %7, %8 : vector<8x1xf32>
    %10 = vector.broadcast %9 : vector<8x1xf32> to vector<8x32xf32>
    %11 = arith.subf %1, %10 : vector<8x32xf32>
    %12 = arith.mulf %11, %11 : vector<8x32xf32>
    %cst_10 = arith.constant dense<0.000000e+00> : vector<8xf32>
    %13 = vector.multi_reduction <add>, %12, %cst_10 [1] : vector<8x32xf32> to vector<8xf32>
    %14 = vector.shape_cast %13 : vector<8xf32> to vector<8x1xf32>
    %cst_11 = arith.constant 3.200000e+01 : f32
    %15 = vector.broadcast %cst_11 : f32 to vector<8x1xf32>
    %16 = arith.divf %14, %15 : vector<8x1xf32>
    %17 = vector.broadcast %9 : vector<8x1xf32> to vector<8x32xf32>
    %18 = arith.subf %1, %17 : vector<8x32xf32>
    %cst_12 = arith.constant 9.99999996E-13 : f32
    %19 = vector.broadcast %cst_12 : f32 to vector<8x1xf32>
    %20 = arith.addf %16, %19 : vector<8x1xf32>
    %21 = math.rsqrt %20 : vector<8x1xf32>
    %22 = vector.broadcast %21 : vector<8x1xf32> to vector<8x32xf32>
    %23 = arith.mulf %18, %22 : vector<8x32xf32>
    %24 = vector.broadcast %4 : vector<1x32xf32> to vector<8x32xf32>
    %25 = arith.mulf %23, %24 : vector<8x32xf32>
    %26 = vector.broadcast %5 : vector<1x32xf32> to vector<8x32xf32>
    %27 = arith.addf %25, %26 : vector<8x32xf32>
    %28 = arith.truncf %27 : vector<8x32xf32> to vector<8x32xbf16>
    %29 = vector.shape_cast %28 : vector<8x32xbf16> to vector<1x8x32xbf16>
    %30 = vector.shape_cast %29 : vector<1x8x32xbf16> to vector<1x8x32xbf16>
    %31 = vector.broadcast %30 : vector<1x8x32xbf16> to vector<4x8x32xbf16>
    %c0_13 = arith.constant 0 : index
    %c0_14 = arith.constant 0 : index
    %c0_15 = arith.constant 0 : index
    %32 = vector.load %arg6[%c0_13, %c0_14, %c0_15] : memref<4x32x8xbf16, #tpu.memory_space<vmem>>, vector<4x32x8xbf16>
    "tpu.trace_start"() <{level = 10 : i32, message = "nsh,nhd->nsd"}> : () -> ()
    %cst_16 = arith.constant dense<0.000000e+00> : vector<4x8x8xf32>
    %33 = tpu.matmul %31, %32, %cst_16 {dimension_numbers = #tpu.dot_dimension_numbers<[2], [1], [1], [2], [0, 0, 0, 1, 1, 2], [0], [0]>} : vector<4x8x32xbf16>, vector<4x32x8xbf16>, vector<4x8x8xf32> -> vector<4x8x8xf32>
    "tpu.trace_stop"() : () -> ()
    %c0_17 = arith.constant 0 : index
    %c0_18 = arith.constant 0 : index
    %c0_19 = arith.constant 0 : index
    %34 = vector.load %arg7[%c0_17, %c0_18, %c0_19] : memref<4x1x8xf32, #tpu.memory_space<vmem>>, vector<4x1x8xf32>
    %35 = vector.broadcast %34 : vector<4x1x8xf32> to vector<4x8x8xf32>
    %36 = arith.addf %33, %35 : vector<4x8x8xf32>
    %c0_20 = arith.constant 0 : index
    %c0_21 = arith.constant 0 : index
    %c0_22 = arith.constant 0 : index
    %37 = vector.load %arg8[%c0_20, %c0_21, %c0_22] : memref<4x32x8xbf16, #tpu.memory_space<vmem>>, vector<4x32x8xbf16>
    "tpu.trace_start"() <{level = 10 : i32, message = "nsh,nhd->nsd"}> : () -> ()
    %cst_23 = arith.constant dense<0.000000e+00> : vector<4x8x8xf32>
    %38 = tpu.matmul %31, %37, %cst_23 {dimension_numbers = #tpu.dot_dimension_numbers<[2], [1], [1], [2], [0, 0, 0, 1, 1, 2], [0], [0]>} : vector<4x8x32xbf16>, vector<4x32x8xbf16>, vector<4x8x8xf32> -> vector<4x8x8xf32>
    "tpu.trace_stop"() : () -> ()
    %c0_24 = arith.constant 0 : index
    %c0_25 = arith.constant 0 : index
    %c0_26 = arith.constant 0 : index
    %39 = vector.load %arg9[%c0_24, %c0_25, %c0_26] : memref<4x1x8xf32, #tpu.memory_space<vmem>>, vector<4x1x8xf32>
    %40 = vector.broadcast %39 : vector<4x1x8xf32> to vector<4x8x8xf32>
    %41 = arith.addf %38, %40 : vector<4x8x8xf32>
    %c0_27 = arith.constant 0 : index
    %c0_28 = arith.constant 0 : index
    %c0_29 = arith.constant 0 : index
    %42 = vector.load %arg10[%c0_27, %c0_28, %c0_29] : memref<4x32x8xbf16, #tpu.memory_space<vmem>>, vector<4x32x8xbf16>
    "tpu.trace_start"() <{level = 10 : i32, message = "nsh,nhd->nsd"}> : () -> ()
    %cst_30 = arith.constant dense<0.000000e+00> : vector<4x8x8xf32>
    %43 = tpu.matmul %31, %42, %cst_30 {dimension_numbers = #tpu.dot_dimension_numbers<[2], [1], [1], [2], [0, 0, 0, 1, 1, 2], [0], [0]>} : vector<4x8x32xbf16>, vector<4x32x8xbf16>, vector<4x8x8xf32> -> vector<4x8x8xf32>
    "tpu.trace_stop"() : () -> ()
    %c0_31 = arith.constant 0 : index
    %c0_32 = arith.constant 0 : index
    %c0_33 = arith.constant 0 : index
    %44 = vector.load %arg11[%c0_31, %c0_32, %c0_33] : memref<4x1x8xf32, #tpu.memory_space<vmem>>, vector<4x1x8xf32>
    %45 = vector.broadcast %44 : vector<4x1x8xf32> to vector<4x8x8xf32>
    %46 = arith.addf %43, %45 : vector<4x8x8xf32>
    %47 = arith.truncf %36 : vector<4x8x8xf32> to vector<4x8x8xbf16>
    %48 = arith.truncf %41 : vector<4x8x8xf32> to vector<4x8x8xbf16>
    "tpu.trace_start"() <{level = 10 : i32, message = "nqd,nkd->nqk"}> : () -> ()
    %cst_34 = arith.constant dense<0.000000e+00> : vector<4x8x8xf32>
    %49 = tpu.matmul %47, %48, %cst_34 {dimension_numbers = #tpu.dot_dimension_numbers<[2], [2], [1], [1], [0, 0, 0, 1, 1, 1], [0], [0]>} : vector<4x8x8xbf16>, vector<4x8x8xbf16>, vector<4x8x8xf32> -> vector<4x8x8xf32>
    "tpu.trace_stop"() : () -> ()
    %50 = vector.shape_cast %3 : vector<1x8xf32> to vector<1x1x8xf32>
    %51 = vector.broadcast %50 : vector<1x1x8xf32> to vector<4x8x8xf32>
    %52 = arith.addf %49, %51 : vector<4x8x8xf32>
    %cst_35 = arith.constant dense<0xFF800000> : vector<4x8xf32>
    %53 = vector.multi_reduction <maximumf>, %52, %cst_35 [2] : vector<4x8x8xf32> to vector<4x8xf32>
    %54 = vector.shape_cast %53 : vector<4x8xf32> to vector<4x8x1xf32>
    %55 = vector.broadcast %54 : vector<4x8x1xf32> to vector<4x8x8xf32>
    %56 = arith.subf %52, %55 : vector<4x8x8xf32>
    %57 = math.exp %56 : vector<4x8x8xf32>
    %cst_36 = arith.constant dense<0.000000e+00> : vector<4x8xf32>
    %58 = vector.multi_reduction <add>, %57, %cst_36 [2] : vector<4x8x8xf32> to vector<4x8xf32>
    %59 = vector.shape_cast %58 : vector<4x8xf32> to vector<4x8x1xf32>
    %60 = vector.broadcast %59 : vector<4x8x1xf32> to vector<4x8x8xf32>
    %61 = arith.divf %57, %60 : vector<4x8x8xf32>
    %62 = arith.truncf %61 : vector<4x8x8xf32> to vector<4x8x8xbf16>
    %63 = arith.truncf %46 : vector<4x8x8xf32> to vector<4x8x8xbf16>
    "tpu.trace_start"() <{level = 10 : i32, message = "nqk,nkd->nqd"}> : () -> ()
    %cst_37 = arith.constant dense<0.000000e+00> : vector<4x8x8xf32>
    %64 = tpu.matmul %62, %63, %cst_37 {dimension_numbers = #tpu.dot_dimension_numbers<[2], [1], [1], [2], [0, 0, 0, 1, 1, 2], [0], [0]>} : vector<4x8x8xbf16>, vector<4x8x8xbf16>, vector<4x8x8xf32> -> vector<4x8x8xf32>
    "tpu.trace_stop"() : () -> ()
    %65 = arith.truncf %64 : vector<4x8x8xf32> to vector<4x8x8xbf16>
    %c0_38 = arith.constant 0 : index
    %c0_39 = arith.constant 0 : index
    %c0_40 = arith.constant 0 : index
    %66 = vector.load %arg12[%c0_38, %c0_39, %c0_40] : memref<4x8x32xbf16, #tpu.memory_space<vmem>>, vector<4x8x32xbf16>
    "tpu.trace_start"() <{level = 10 : i32, message = "nqd,ndh->nqh"}> : () -> ()
    %cst_41 = arith.constant dense<0.000000e+00> : vector<4x8x32xf32>
    %67 = tpu.matmul %65, %66, %cst_41 {dimension_numbers = #tpu.dot_dimension_numbers<[2], [1], [1], [2], [0, 0, 0, 1, 1, 2], [0], [0]>} : vector<4x8x8xbf16>, vector<4x8x32xbf16>, vector<4x8x32xf32> -> vector<4x8x32xf32>
    "tpu.trace_stop"() : () -> ()
    %cst_42 = arith.constant dense<0.000000e+00> : vector<8x32xf32>
    %68 = vector.multi_reduction <add>, %67, %cst_42 [0] : vector<4x8x32xf32> to vector<8x32xf32>
    %c0_43 = arith.constant 0 : index
    %c0_44 = arith.constant 0 : index
    %69 = vector.load %arg13[%c0_43, %c0_44] : memref<1x32xf32, #tpu.memory_space<vmem>>, vector<1x32xf32>
    %70 = vector.broadcast %69 : vector<1x32xf32> to vector<8x32xf32>
    %71 = arith.addf %68, %70 : vector<8x32xf32>
    %72 = arith.addf %27, %71 : vector<8x32xf32>
    %c0_45 = arith.constant 0 : index
    %c0_46 = arith.constant 0 : index
    %73 = vector.load %arg14[%c0_45, %c0_46] : memref<1x32xf32, #tpu.memory_space<vmem>>, vector<1x32xf32>
    %c0_47 = arith.constant 0 : index
    %c0_48 = arith.constant 0 : index
    %74 = vector.load %arg15[%c0_47, %c0_48] : memref<1x32xf32, #tpu.memory_space<vmem>>, vector<1x32xf32>
    %cst_49 = arith.constant dense<0.000000e+00> : vector<8xf32>
    %75 = vector.multi_reduction <add>, %72, %cst_49 [1] : vector<8x32xf32> to vector<8xf32>
    %76 = vector.shape_cast %75 : vector<8xf32> to vector<8x1xf32>
    %cst_50 = arith.constant 3.200000e+01 : f32
    %77 = vector.broadcast %cst_50 : f32 to vector<8x1xf32>
    %78 = arith.divf %76, %77 : vector<8x1xf32>
    %79 = vector.broadcast %78 : vector<8x1xf32> to vector<8x32xf32>
    %80 = arith.subf %72, %79 : vector<8x32xf32>
    %81 = arith.mulf %80, %80 : vector<8x32xf32>
    %cst_51 = arith.constant dense<0.000000e+00> : vector<8xf32>
    %82 = vector.multi_reduction <add>, %81, %cst_51 [1] : vector<8x32xf32> to vector<8xf32>
    %83 = vector.shape_cast %82 : vector<8xf32> to vector<8x1xf32>
    %cst_52 = arith.constant 3.200000e+01 : f32
    %84 = vector.broadcast %cst_52 : f32 to vector<8x1xf32>
    %85 = arith.divf %83, %84 : vector<8x1xf32>
    %86 = vector.broadcast %78 : vector<8x1xf32> to vector<8x32xf32>
    %87 = arith.subf %72, %86 : vector<8x32xf32>
    %cst_53 = arith.constant 9.99999996E-13 : f32
    %88 = vector.broadcast %cst_53 : f32 to vector<8x1xf32>
    %89 = arith.addf %85, %88 : vector<8x1xf32>
    %90 = math.rsqrt %89 : vector<8x1xf32>
    %91 = vector.broadcast %90 : vector<8x1xf32> to vector<8x32xf32>
    %92 = arith.mulf %87, %91 : vector<8x32xf32>
    %93 = vector.broadcast %73 : vector<1x32xf32> to vector<8x32xf32>
    %94 = arith.mulf %92, %93 : vector<8x32xf32>
    %95 = vector.broadcast %74 : vector<1x32xf32> to vector<8x32xf32>
    %96 = arith.addf %94, %95 : vector<8x32xf32>
    %97 = arith.truncf %96 : vector<8x32xf32> to vector<8x32xbf16>
    %c0_54 = arith.constant 0 : index
    %c0_55 = arith.constant 0 : index
    %98 = vector.load %arg16[%c0_54, %c0_55] : memref<32x64xbf16, #tpu.memory_space<vmem>>, vector<32x64xbf16>
    %cst_56 = arith.constant dense<0.000000e+00> : vector<8x64xf32>
    %99 = tpu.matmul %97, %98, %cst_56 {dimension_numbers = #tpu.dot_dimension_numbers<[1], [0], [0], [1], [0, 0, 1, 1], [], []>} : vector<8x32xbf16>, vector<32x64xbf16>, vector<8x64xf32> -> vector<8x64xf32>
    %c0_57 = arith.constant 0 : index
    %c0_58 = arith.constant 0 : index
    %100 = vector.load %arg17[%c0_57, %c0_58] : memref<1x64xf32, #tpu.memory_space<vmem>>, vector<1x64xf32>
    %101 = vector.broadcast %100 : vector<1x64xf32> to vector<8x64xf32>
    %102 = arith.addf %99, %101 : vector<8x64xf32>
    %103 = arith.mulf %102, %102 : vector<8x64xf32>
    %104 = arith.mulf %102, %103 : vector<8x64xf32>
    %cst_59 = arith.constant 4.471500e-02 : f32
    %105 = vector.broadcast %cst_59 : f32 to vector<8x64xf32>
    %106 = arith.mulf %105, %104 : vector<8x64xf32>
    %107 = arith.addf %102, %106 : vector<8x64xf32>
    %cst_60 = arith.constant 0.797884583 : f32
    %108 = vector.broadcast %cst_60 : f32 to vector<8x64xf32>
    %109 = arith.mulf %108, %107 : vector<8x64xf32>
    %110 = math.tanh %109 : vector<8x64xf32>
    %cst_61 = arith.constant 1.000000e+00 : f32
    %111 = vector.broadcast %cst_61 : f32 to vector<8x64xf32>
    %112 = arith.addf %111, %110 : vector<8x64xf32>
    %cst_62 = arith.constant 5.000000e-01 : f32
    %113 = vector.broadcast %cst_62 : f32 to vector<8x64xf32>
    %114 = arith.mulf %113, %112 : vector<8x64xf32>
    %115 = arith.mulf %102, %114 : vector<8x64xf32>
    %116 = arith.truncf %115 : vector<8x64xf32> to vector<8x64xbf16>
    %c0_63 = arith.constant 0 : index
    %c0_64 = arith.constant 0 : index
    %117 = vector.load %arg18[%c0_63, %c0_64] : memref<64x32xbf16, #tpu.memory_space<vmem>>, vector<64x32xbf16>
    %cst_65 = arith.constant dense<0.000000e+00> : vector<8x32xf32>
    %118 = tpu.matmul %116, %117, %cst_65 {dimension_numbers = #tpu.dot_dimension_numbers<[1], [0], [0], [1], [0, 0, 1, 1], [], []>} : vector<8x64xbf16>, vector<64x32xbf16>, vector<8x32xf32> -> vector<8x32xf32>
    %c0_66 = arith.constant 0 : index
    %c0_67 = arith.constant 0 : index
    %119 = vector.load %arg19[%c0_66, %c0_67] : memref<1x32xf32, #tpu.memory_space<vmem>>, vector<1x32xf32>
    %120 = vector.broadcast %119 : vector<1x32xf32> to vector<8x32xf32>
    %121 = arith.addf %118, %120 : vector<8x32xf32>
    %122 = arith.addf %96, %121 : vector<8x32xf32>
    %c0_68 = arith.constant 0 : index
    %c0_69 = arith.constant 0 : index
    %123 = vector.load %arg20[%c0_68, %c0_69] : memref<1x32xf32, #tpu.memory_space<vmem>>, vector<1x32xf32>
    %c0_70 = arith.constant 0 : index
    %c0_71 = arith.constant 0 : index
    %124 = vector.load %arg21[%c0_70, %c0_71] : memref<1x32xf32, #tpu.memory_space<vmem>>, vector<1x32xf32>
    %cst_72 = arith.constant dense<0.000000e+00> : vector<8xf32>
    %125 = vector.multi_reduction <add>, %122, %cst_72 [1] : vector<8x32xf32> to vector<8xf32>
    %126 = vector.shape_cast %125 : vector<8xf32> to vector<8x1xf32>
    %cst_73 = arith.constant 3.200000e+01 : f32
    %127 = vector.broadcast %cst_73 : f32 to vector<8x1xf32>
    %128 = arith.divf %126, %127 : vector<8x1xf32>
    %129 = vector.broadcast %128 : vector<8x1xf32> to vector<8x32xf32>
    %130 = arith.subf %122, %129 : vector<8x32xf32>
    %131 = arith.mulf %130, %130 : vector<8x32xf32>
    %cst_74 = arith.constant dense<0.000000e+00> : vector<8xf32>
    %132 = vector.multi_reduction <add>, %131, %cst_74 [1] : vector<8x32xf32> to vector<8xf32>
    %133 = vector.shape_cast %132 : vector<8xf32> to vector<8x1xf32>
    %cst_75 = arith.constant 3.200000e+01 : f32
    %134 = vector.broadcast %cst_75 : f32 to vector<8x1xf32>
    %135 = arith.divf %133, %134 : vector<8x1xf32>
    %136 = vector.broadcast %128 : vector<8x1xf32> to vector<8x32xf32>
    %137 = arith.subf %122, %136 : vector<8x32xf32>
    %cst_76 = arith.constant 9.99999996E-13 : f32
    %138 = vector.broadcast %cst_76 : f32 to vector<8x1xf32>
    %139 = arith.addf %135, %138 : vector<8x1xf32>
    %140 = math.rsqrt %139 : vector<8x1xf32>
    %141 = vector.broadcast %140 : vector<8x1xf32> to vector<8x32xf32>
    %142 = arith.mulf %137, %141 : vector<8x32xf32>
    %143 = vector.broadcast %123 : vector<1x32xf32> to vector<8x32xf32>
    %144 = arith.mulf %142, %143 : vector<8x32xf32>
    %145 = vector.broadcast %124 : vector<1x32xf32> to vector<8x32xf32>
    %146 = arith.addf %144, %145 : vector<8x32xf32>
    %147 = arith.truncf %146 : vector<8x32xf32> to vector<8x32xbf16>
    %c0_77 = arith.constant 0 : index
    %c0_78 = arith.constant 0 : index
    %148 = vector.load %arg22[%c0_77, %c0_78] : memref<32x16xbf16, #tpu.memory_space<vmem>>, vector<32x16xbf16>
    %cst_79 = arith.constant dense<0.000000e+00> : vector<8x16xf32>
    %149 = tpu.matmul %147, %148, %cst_79 {dimension_numbers = #tpu.dot_dimension_numbers<[1], [0], [0], [1], [0, 0, 1, 1], [], []>} : vector<8x32xbf16>, vector<32x16xbf16>, vector<8x16xf32> -> vector<8x16xf32>
    %c0_80 = arith.constant 0 : index
    %c0_81 = arith.constant 0 : index
    %150 = vector.load %arg23[%c0_80, %c0_81] : memref<1x16xf32, #tpu.memory_space<vmem>>, vector<1x16xf32>
    %151 = vector.broadcast %150 : vector<1x16xf32> to vector<8x16xf32>
    %152 = arith.addf %149, %151 : vector<8x16xf32>
    %c8_i32 = arith.constant 8 : i32
    %153 = arith.muli %arg0, %c8_i32 : i32
    %154 = tpu.iota {dimensions = array<i32: 0>} : vector<8x16xi32>
    %155 = vector.broadcast %153 : i32 to vector<8x16xi32>
    %156 = arith.addi %154, %155 : vector<8x16xi32>
    %157 = tpu.iota {dimensions = array<i32: 1>} : vector<8x16xi32>
    %c0_82 = arith.constant 0 : index
    %158 = memref.load %arg1[%c0_82] : memref<1xi32, #tpu.memory_space<smem>>
    %c16_i32 = arith.constant 16 : i32
    %159 = vector.broadcast %c16_i32 : i32 to vector<8x16xi32>
    %160 = arith.muli %156, %159 : vector<8x16xi32>
    %161 = arith.addi %160, %157 : vector<8x16xi32>
    %c-1640531527_i32 = arith.constant -1640531527 : i32
    %162 = arith.muli %158, %c-1640531527_i32 : i32
    %163 = vector.broadcast %162 : i32 to vector<8x16xi32>
    %164 = arith.xori %161, %163 : vector<8x16xi32>
    %c-2048144789_i32 = arith.constant -2048144789 : i32
    %165 = vector.broadcast %c-2048144789_i32 : i32 to vector<8x16xi32>
    %166 = arith.muli %164, %165 : vector<8x16xi32>
    %c13_i32 = arith.constant 13 : i32
    %167 = vector.broadcast %c13_i32 : i32 to vector<8x16xi32>
    %168 = arith.shrui %166, %167 : vector<8x16xi32>
    %169 = arith.xori %166, %168 : vector<8x16xi32>
    %c-1028477387_i32 = arith.constant -1028477387 : i32
    %170 = vector.broadcast %c-1028477387_i32 : i32 to vector<8x16xi32>
    %171 = arith.muli %169, %170 : vector<8x16xi32>
    %c16_i32_83 = arith.constant 16 : i32
    %172 = vector.broadcast %c16_i32_83 : i32 to vector<8x16xi32>
    %173 = arith.shrui %171, %172 : vector<8x16xi32>
    %174 = arith.xori %171, %173 : vector<8x16xi32>
    %c8_i32_84 = arith.constant 8 : i32
    %175 = vector.broadcast %c8_i32_84 : i32 to vector<8x16xi32>
    %176 = arith.shrui %174, %175 : vector<8x16xi32>
    %177 = arith.uitofp %176 : vector<8x16xi32> to vector<8x16xf32>
    %cst_85 = arith.constant 5.96046448E-8 : f32
    %178 = vector.broadcast %cst_85 : f32 to vector<8x16xf32>
    %179 = arith.mulf %177, %178 : vector<8x16xf32>
    %cst_86 = arith.constant 2.000000e-01 : f32
    %180 = vector.broadcast %cst_86 : f32 to vector<8x16xf32>
    %181 = arith.cmpf oge, %179, %180 : vector<8x16xf32>
    %cst_87 = arith.constant 1.250000e+00 : f32
    %182 = vector.broadcast %cst_87 : f32 to vector<8x16xf32>
    %183 = arith.mulf %152, %182 : vector<8x16xf32>
    %cst_88 = arith.constant 0.000000e+00 : f32
    %184 = vector.broadcast %cst_88 : f32 to vector<8x16xf32>
    %185 = arith.select %181, %183, %184 : vector<8x16xi1>, vector<8x16xf32>
    %c0_89 = arith.constant 0 : index
    %c0_90 = arith.constant 0 : index
    %c0_91 = arith.constant 0 : index
    %186 = vector.load %arg24[%c0_89, %c0_90, %c0_91] : memref<1x8x16xf32, #tpu.memory_space<vmem>>, vector<1x8x16xf32>
    %187 = vector.shape_cast %186 : vector<1x8x16xf32> to vector<8x16xf32>
    %188 = vector.shape_cast %185 : vector<8x16xf32> to vector<1x8x16xf32>
    tpu.vector_store %arg24[%c0_89, %c0_90, %c0_91], %188 {strides = array<i32>} : memref<1x8x16xf32, #tpu.memory_space<vmem>>, vector<1x8x16xf32>,
    return
  }
  func.func @transform_0(%arg0: i32, %arg1: memref<1xi32, #tpu.memory_space<smem>>) -> (i32, i32, i32) {
    %c0_i32 = arith.constant 0 : i32
    %c0_i32_0 = arith.constant 0 : i32
    %c0_i32_1 = arith.constant 0 : i32
    return %arg0, %c0_i32, %c0_i32_0 : i32, i32, i32
  }
  func.func @transform_1(%arg0: i32, %arg1: memref<1xi32, #tpu.memory_space<smem>>) -> (i32, i32, i32) {
    %c0_i32 = arith.constant 0 : i32
    %c0_i32_0 = arith.constant 0 : i32
    %c0_i32_1 = arith.constant 0 : i32
    return %arg0, %c0_i32, %c0_i32_0 : i32, i32, i32
  }
  func.func @transform_2(%arg0: i32, %arg1: memref<1xi32, #tpu.memory_space<smem>>) -> (i32, i32) {
    %c0_i32 = arith.constant 0 : i32
    %c0_i32_0 = arith.constant 0 : i32
    %c0_i32_1 = arith.constant 0 : i32
    return %c0_i32, %c0_i32_0 : i32, i32
  }
  func.func @transform_3(%arg0: i32, %arg1: memref<1xi32, #tpu.memory_space<smem>>) -> (i32, i32) {
    %c0_i32 = arith.constant 0 : i32
    %c0_i32_0 = arith.constant 0 : i32
    %c0_i32_1 = arith.constant 0 : i32
    return %c0_i32, %c0_i32_0 : i32, i32
  }
  func.func @transform_4(%arg0: i32, %arg1: memref<1xi32, #tpu.memory_space<smem>>) -> (i32, i32, i32) {
    %c0_i32 = arith.constant 0 : i32
    %c0_i32_0 = arith.constant 0 : i32
    %c0_i32_1 = arith.constant 0 : i32
    %c0_i32_2 = arith.constant 0 : i32
    return %c0_i32, %c0_i32_0, %c0_i32_1 : i32, i32, i32
  }
  func.func @transform_5(%arg0: i32, %arg1: memref<1xi32, #tpu.memory_space<smem>>) -> (i32, i32, i32) {
    %c0_i32 = arith.constant 0 : i32
    %c0_i32_0 = arith.constant 0 : i32
    %c0_i32_1 = arith.constant 0 : i32
    %c0_i32_2 = arith.constant 0 : i32
    return %c0_i32, %c0_i32_0, %c0_i32_1 : i32, i32, i32
  }
  func.func @transform_6(%arg0: i32, %arg1: memref<1xi32, #tpu.memory_space<smem>>) -> (i32, i32, i32) {
    %c0_i32 = arith.constant 0 : i32
    %c0_i32_0 = arith.constant 0 : i32
    %c0_i32_1 = arith.constant 0 : i32
    %c0_i32_2 = arith.constant 0 : i32
    return %c0_i32, %c0_i32_0, %c0_i32_1 : i32, i32, i32
  }
  func.func @transform_7(%arg0: i32, %arg1: memref<1xi32, #tpu.memory_space<smem>>) -> (i32, i32, i32) {
    %c0_i32 = arith.constant 0 : i32
    %c0_i32_0 = arith.constant 0 : i32
    %c0_i32_1 = arith.constant 0 : i32
    %c0_i32_2 = arith.constant 0 : i32
    return %c0_i32, %c0_i32_0, %c0_i32_1 : i32, i32, i32
  }
  func.func @transform_8(%arg0: i32, %arg1: memref<1xi32, #tpu.memory_space<smem>>) -> (i32, i32, i32) {
    %c0_i32 = arith.constant 0 : i32
    %c0_i32_0 = arith.constant 0 : i32
    %c0_i32_1 = arith.constant 0 : i32
    %c0_i32_2 = arith.constant 0 : i32
    return %c0_i32, %c0_i32_0, %c0_i32_1 : i32, i32, i32
  }
  func.func @transform_9(%arg0: i32, %arg1: memref<1xi32, #tpu.memory_space<smem>>) -> (i32, i32, i32) {
    %c0_i32 = arith.constant 0 : i32
    %c0_i32_0 = arith.constant 0 : i32
    %c0_i32_1 = arith.constant 0 : i32
    %c0_i32_2 = arith.constant 0 : i32
    return %c0_i32, %c0_i32_0, %c0_i32_1 : i32, i32, i32
  }
  func.func @transform_10(%arg0: i32, %arg1: memref<1xi32, #tpu.memory_space<smem>>) -> (i32, i32, i32) {
    %c0_i32 = arith.constant 0 : i32
    %c0_i32_0 = arith.constant 0 : i32
    %c0_i32_1 = arith.constant 0 : i32
    %c0_i32_2 = arith.constant 0 : i32
    return %c0_i32, %c0_i32_0, %c0_i32_1 : i32, i32, i32
  }
  func.func @transform_11(%arg0: i32, %arg1: memref<1xi32, #tpu.memory_space<smem>>) -> (i32, i32) {
    %c0_i32 = arith.constant 0 : i32
    %c0_i32_0 = arith.constant 0 : i32
    %c0_i32_1 = arith.constant 0 : i32
    return %c0_i32, %c0_i32_0 : i32, i32
  }
  func.func @transform_12(%arg0: i32, %arg1: memref<1xi32, #tpu.memory_space<smem>>) -> (i32, i32) {
    %c0_i32 = arith.constant 0 : i32
    %c0_i32_0 = arith.constant 0 : i32
    %c0_i32_1 = arith.constant 0 : i32
    return %c0_i32, %c0_i32_0 : i32, i32
  }
  func.func @transform_13(%arg0: i32, %arg1: memref<1xi32, #tpu.memory_space<smem>>) -> (i32, i32) {
    %c0_i32 = arith.constant 0 : i32
    %c0_i32_0 = arith.constant 0 : i32
    %c0_i32_1 = arith.constant 0 : i32
    return %c0_i32, %c0_i32_0 : i32, i32
  }
  func.func @transform_14(%arg0: i32, %arg1: memref<1xi32, #tpu.memory_space<smem>>) -> (i32, i32) {
    %c0_i32 = arith.constant 0 : i32
    %c0_i32_0 = arith.constant 0 : i32
    %c0_i32_1 = arith.constant 0 : i32
    return %c0_i32, %c0_i32_0 : i32, i32
  }
  func.func @transform_15(%arg0: i32, %arg1: memref<1xi32, #tpu.memory_space<smem>>) -> (i32, i32) {
    %c0_i32 = arith.constant 0 : i32
    %c0_i32_0 = arith.constant 0 : i32
    %c0_i32_1 = arith.constant 0 : i32
    return %c0_i32, %c0_i32_0 : i32, i32
  }
  func.func @transform_16(%arg0: i32, %arg1: memref<1xi32, #tpu.memory_space<smem>>) -> (i32, i32) {
    %c0_i32 = arith.constant 0 : i32
    %c0_i32_0 = arith.constant 0 : i32
    %c0_i32_1 = arith.constant 0 : i32
    return %c0_i32, %c0_i32_0 : i32, i32
  }
  func.func @transform_17(%arg0: i32, %arg1: memref<1xi32, #tpu.memory_space<smem>>) -> (i32, i32) {
    %c0_i32 = arith.constant 0 : i32
    %c0_i32_0 = arith.constant 0 : i32
    %c0_i32_1 = arith.constant 0 : i32
    return %c0_i32, %c0_i32_0 : i32, i32
  }
  func.func @transform_18(%arg0: i32, %arg1: memref<1xi32, #tpu.memory_space<smem>>) -> (i32, i32) {
    %c0_i32 = arith.constant 0 : i32
    %c0_i32_0 = arith.constant 0 : i32
    %c0_i32_1 = arith.constant 0 : i32
    return %c0_i32, %c0_i32_0 : i32, i32
  }
  func.func @transform_19(%arg0: i32, %arg1: memref<1xi32, #tpu.memory_space<smem>>) -> (i32, i32) {
    %c0_i32 = arith.constant 0 : i32
    %c0_i32_0 = arith.constant 0 : i32
    %c0_i32_1 = arith.constant 0 : i32
    return %c0_i32, %c0_i32_0 : i32, i32
  }
  func.func @transform_20(%arg0: i32, %arg1: memref<1xi32, #tpu.memory_space<smem>>) -> (i32, i32) {
    %c0_i32 = arith.constant 0 : i32
    %c0_i32_0 = arith.constant 0 : i32
    %c0_i32_1 = arith.constant 0 : i32
    return %c0_i32, %c0_i32_0 : i32, i32
  }
  func.func @transform_21(%arg0: i32, %arg1: memref<1xi32, #tpu.memory_space<smem>>) -> (i32, i32) {
    %c0_i32 = arith.constant 0 : i32
    %c0_i32_0 = arith.constant 0 : i32
    %c0_i32_1 = arith.constant 0 : i32
    return %c0_i32, %c0_i32_0 : i32, i32
  }
  func.func @transform_22(%arg0: i32, %arg1: memref<1xi32, #tpu.memory_space<smem>>) -> (i32, i32, i32) {
    %c0_i32 = arith.constant 0 : i32
    %c0_i32_0 = arith.constant 0 : i32
    %c0_i32_1 = arith.constant 0 : i32
    return %arg0, %c0_i32, %c0_i32_0 : i32, i32, i32
  }
}

</mosaic_0001>

<llo_original>
// kernel: tpu_custom_call.1
$region0: #{tpu_custom_call.1}
  #allocation0 [shape = 'u32[]', space=smem, size = 0x4, offset = 0x4, fixed_abs, tag = 'smem constant byte address 0x4 - core index']
  #allocation1 [shape = 'u32[144,128]{1,0:T(1,128)}', space=vmem, size = 0x12000, scoped, tag = 'internal scratch']
  #allocation2 [shape = 's32[1]{0}', space=sflag, size = 0x4, scoped, tag = 'scoped memory for tpu_custom_call.1']
  #allocation3 [shape = 's32[1]{0:T(128)S(6)}', space=smem, size = 0x200, scoped, tag = 'prefetched SMEM operand 0']
  %s0 = inlined_call_operand.<no memory space> [shape: s32[1], index: 0, kind: input, shape index: {}]
  %s1 = inlined_call_operand.vmem [shape: f32[2,8,32], index: 1, kind: input, shape index: {}]
  %s2 = inlined_call_operand.vmem [shape: f32[2,1,8], index: 2, kind: input, shape index: {}]
  %s3 = inlined_call_operand.vmem [shape: f32[1,32], index: 3, kind: input, shape index: {}]
  %s4 = inlined_call_operand.vmem [shape: f32[1,32], index: 4, kind: input, shape index: {}]
  %s5 = inlined_call_operand.vmem [shape: bf16[4,32,8], index: 5, kind: input, shape index: {}]
  %s6 = inlined_call_operand.vmem [shape: f32[4,1,8], index: 6, kind: input, shape index: {}]
  %s7 = inlined_call_operand.vmem [shape: bf16[4,32,8], index: 7, kind: input, shape index: {}]
  %s8 = inlined_call_operand.vmem [shape: f32[4,1,8], index: 8, kind: input, shape index: {}]
  %s9 = inlined_call_operand.vmem [shape: bf16[4,32,8], index: 9, kind: input, shape index: {}]
  %s10 = inlined_call_operand.vmem [shape: f32[4,1,8], index: 10, kind: input, shape index: {}]
  %s11 = inlined_call_operand.vmem [shape: bf16[4,8,32], index: 11, kind: input, shape index: {}]
  %s12 = inlined_call_operand.vmem [shape: f32[1,32], index: 12, kind: input, shape index: {}]
  %s13 = inlined_call_operand.vmem [shape: f32[1,32], index: 13, kind: input, shape index: {}]
  %s14 = inlined_call_operand.vmem [shape: f32[1,32], index: 14, kind: input, shape index: {}]
  %s15 = inlined_call_operand.vmem [shape: bf16[32,64], index: 15, kind: input, shape index: {}]
  %s16 = inlined_call_operand.vmem [shape: f32[1,64], index: 16, kind: input, shape index: {}]
  %s17 = inlined_call_operand.vmem [shape: bf16[64,32], index: 17, kind: input, shape index: {}]
  %s18 = inlined_call_operand.vmem [shape: f32[1,32], index: 18, kind: input, shape index: {}]
  %s19 = inlined_call_operand.vmem [shape: f32[1,32], index: 19, kind: input, shape index: {}]
  %s20 = inlined_call_operand.vmem [shape: f32[1,32], index: 20, kind: input, shape index: {}]
  %s21 = inlined_call_operand.vmem [shape: bf16[32,16], index: 21, kind: input, shape index: {}]
  %s22 = inlined_call_operand.vmem [shape: f32[1,16], index: 22, kind: input, shape index: {}]
  %s23 = inlined_call_operand.hbm [shape: f32[2,8,16], index: 23, kind: output, shape index: {}]
  %s24 = sld [smem:[#allocation0]]
  $region121: #{tpu_custom_call.1} parent=0
    _
  %s26 = ssub.s32 1, %s24
  %s27 = scalar_select 0, %s26, %s24
  %28 = sst [smem:[#allocation3]] %s0
  $region1: #{tpu_custom_call.1} parent=0
    #allocation4 [shape = 'u8[8192]{0}', space=vmem, size = 0x2000, scoped, tag = 'output window, operand 0']
    #allocation5 [shape = 's32[2]{0}', space=sflag, size = 0x8, scoped, tag = 'scoped memory for tpu_custom_call.1']
    %29 = vsyncpa [#allocation5], 0
    %s30 = scalar_lea.sflag [#allocation5], 1
    %31 = vsyncpa %s30, 0
    loop: start=0, step=1, limit=4
    $region2: #{tpu_custom_call.1} parent=1 // loop_pre_header
      _
    $region3: #{tpu_custom_call.1} parent=1 // loop_header
      %s33 = sphi 0, %s37
      %p34 = scmp.ge.s32.totalorder %s33, 4
      %s43 = sphi 0, %s45
      %s46 = sphi 0, %s43
      %s47 = sphi 0, %s46
      %s63 = sphi 0, %s47
      %s69 = sphi 0, %s71
      %s72 = sphi 0, %s69
      %s73 = sphi 0, %s72
      %s89 = sphi 0, %s73
      %s93 = sphi 0, %s93
      %s95 = sphi 0, %s93
      %s96 = sphi 0, %s95
      %s110 = sphi 0, %s96
      %s114 = sphi 0, %s114
      %s116 = sphi 0, %s114
      %s117 = sphi 0, %s116
      %s131 = sphi 0, %s117
      %s135 = sphi 0, %s135
      %s137 = sphi 0, %s135
      %s138 = sphi 0, %s137
      %s152 = sphi 0, %s138
      %s156 = sphi 0, %s156
      %s158 = sphi 0, %s156
      %s159 = sphi 0, %s158
      %s173 = sphi 0, %s159
      %s177 = sphi 0, %s177
      %s179 = sphi 0, %s177
      %s180 = sphi 0, %s179
      %s194 = sphi 0, %s180
      %s198 = sphi 0, %s198
      %s200 = sphi 0, %s198
      %s201 = sphi 0, %s200
      %s215 = sphi 0, %s201
      %s219 = sphi 0, %s219
      %s221 = sphi 0, %s219
      %s222 = sphi 0, %s221
      %s236 = sphi 0, %s222
      %s240 = sphi 0, %s240
      %s242 = sphi 0, %s240
      %s243 = sphi 0, %s242
      %s257 = sphi 0, %s243
      %s261 = sphi 0, %s261
      %s263 = sphi 0, %s261
      %s264 = sphi 0, %s263
      %s278 = sphi 0, %s264
      %s282 = sphi 0, %s282
      %s284 = sphi 0, %s282
      %s285 = sphi 0, %s284
      %s299 = sphi 0, %s285
      %s303 = sphi 0, %s303
      %s305 = sphi 0, %s303
      %s306 = sphi 0, %s305
      %s320 = sphi 0, %s306
      %s324 = sphi 0, %s324
      %s326 = sphi 0, %s324
      %s327 = sphi 0, %s326
      %s341 = sphi 0, %s327
      %s345 = sphi 0, %s345
      %s347 = sphi 0, %s345
      %s348 = sphi 0, %s347
      %s362 = sphi 0, %s348
      %s366 = sphi 0, %s366
      %s368 = sphi 0, %s366
      %s369 = sphi 0, %s368
      %s383 = sphi 0, %s369
      %s387 = sphi 0, %s387
      %s389 = sphi 0, %s387
      %s390 = sphi 0, %s389
      %s404 = sphi 0, %s390
      %s408 = sphi 0, %s408
      %s410 = sphi 0, %s408
      %s411 = sphi 0, %s410
      %s425 = sphi 0, %s411
      %s429 = sphi 0, %s429
      %s431 = sphi 0, %s429
      %s432 = sphi 0, %s431
      %s446 = sphi 0, %s432
      %s450 = sphi 0, %s450
      %s452 = sphi 0, %s450
      %s453 = sphi 0, %s452
      %s467 = sphi 0, %s453
      %s471 = sphi 0, %s471
      %s473 = sphi 0, %s471
      %s474 = sphi 0, %s473
      %s488 = sphi 0, %s474
      %s492 = sphi 0, %s492
      %s494 = sphi 0, %s492
      %s495 = sphi 0, %s494
      %s509 = sphi 0, %s495
      %s515 = sphi 0, %s517
      %s518 = sphi 0, %s515
      %s519 = sphi 0, %s518
      %s535 = sphi 0, %s519
    $region4: #{tpu_custom_call.1} parent=1 // loop_header_branch
      %36 = sbr.rel (%p34) target = $region8
    $region5: #{tpu_custom_call.1} parent=1 // loop_body
      %s38 = ssub.s32 %s33, 1
      %s39 = ssub.s32 %s33, 2
      %s40 = sadd.s32 %s33, 1
      %s41 = ssub.s32 %s33, %s40
      %p42 = scmp.eq.s32.totalorder %s41, 0
      %s44 = sadd.s32 %s43, 1
      %s45 = scalar_select %p42, %s43, %s44
      %p48 = pneg %p42
      %p49 = scmp.eq.s32.totalorder %s33, 1
      %p50 = por %p48, %p49
      %p51 = scmp.ne.s32.totalorder %s43, %s46
      %p52 = scmp.eq.s32.totalorder %s33, 0
      %p53 = por %p51, %p52
      %p54 = scmp.ne.s32.totalorder %s43, %s46
      %p55 = scmp.eq.s32.totalorder %s38, 1
      %p56 = por %p54, %p55
      %p57 = scmp.ne.s32.totalorder %s46, %s47
      %p58 = scmp.eq.s32.totalorder %s38, 0
      %p59 = por %p57, %p58
      %p60 = scmp.ne.s32.totalorder %s46, %s47
      %p61 = scmp.eq.s32.totalorder %s39, 1
      %p62 = por %p60, %p61
      %p64 = scmp.ne.s32.totalorder %s47, %s63
      %p65 = scmp.eq.s32.totalorder %s39, 0
      %p66 = por %p64, %p65
      %s67 = ssub.s32 %s33, %s40
      %p68 = scmp.eq.s32.totalorder %s67, 0
      %s70 = sadd.s32 %s69, 1
      %s71 = scalar_select %p68, %s69, %s70
      %p74 = pneg %p68
      %p75 = scmp.eq.s32.totalorder %s33, 1
      %p76 = por %p74, %p75
      %p77 = scmp.ne.s32.totalorder %s69, %s72
      %p78 = scmp.eq.s32.totalorder %s33, 0
      %p79 = por %p77, %p78
      %p80 = scmp.ne.s32.totalorder %s69, %s72
      %p81 = scmp.eq.s32.totalorder %s38, 1
      %p82 = por %p80, %p81
      %p83 = scmp.ne.s32.totalorder %s72, %s73
      %p84 = scmp.eq.s32.totalorder %s38, 0
      %p85 = por %p83, %p84
      %p86 = scmp.ne.s32.totalorder %s72, %s73
      %p87 = scmp.eq.s32.totalorder %s39, 1
      %p88 = por %p86, %p87
      %p90 = scmp.ne.s32.totalorder %s73, %s89
      %p91 = scmp.eq.s32.totalorder %s39, 0
      %p92 = por %p90, %p91
      %s94 = sadd.s32 %s93, 1
      %p97 = scmp.eq.s32.totalorder %s33, 1
      %p98 = scmp.ne.s32.totalorder %s93, %s95
      %p99 = scmp.eq.s32.totalorder %s33, 0
      %p100 = por %p98, %p99
      %p101 = scmp.ne.s32.totalorder %s93, %s95
      %p102 = scmp.eq.s32.totalorder %s38, 1
      %p103 = por %p101, %p102
      %p104 = scmp.ne.s32.totalorder %s95, %s96
      %p105 = scmp.eq.s32.totalorder %s38, 0
      %p106 = por %p104, %p105
      %p107 = scmp.ne.s32.totalorder %s95, %s96
      %p108 = scmp.eq.s32.totalorder %s39, 1
      %p109 = por %p107, %p108
      %p111 = scmp.ne.s32.totalorder %s96, %s110
      %p112 = scmp.eq.s32.totalorder %s39, 0
      %p113 = por %p111, %p112
      %s115 = sadd.s32 %s114, 1
      %p118 = scmp.eq.s32.totalorder %s33, 1
      %p119 = scmp.ne.s32.totalorder %s114, %s116
      %p120 = scmp.eq.s32.totalorder %s33, 0
      %p121 = por %p119, %p120
      %p122 = scmp.ne.s32.totalorder %s114, %s116
      %p123 = scmp.eq.s32.totalorder %s38, 1
      %p124 = por %p122, %p123
      %p125 = scmp.ne.s32.totalorder %s116, %s117
      %p126 = scmp.eq.s32.totalorder %s38, 0
      %p127 = por %p125, %p126
      %p128 = scmp.ne.s32.totalorder %s116, %s117
      %p129 = scmp.eq.s32.totalorder %s39, 1
      %p130 = por %p128, %p129
      %p132 = scmp.ne.s32.totalorder %s117, %s131
      %p133 = scmp.eq.s32.totalorder %s39, 0
      %p134 = por %p132, %p133
      %s136 = sadd.s32 %s135, 1
      %p139 = scmp.eq.s32.totalorder %s33, 1
      %p140 = scmp.ne.s32.totalorder %s135, %s137
      %p141 = scmp.eq.s32.totalorder %s33, 0
      %p142 = por %p140, %p141
      %p143 = scmp.ne.s32.totalorder %s135, %s137
      %p144 = scmp.eq.s32.totalorder %s38, 1
      %p145 = por %p143, %p144
      %p146 = scmp.ne.s32.totalorder %s137, %s138
      %p147 = scmp.eq.s32.totalorder %s38, 0
      %p148 = por %p146, %p147
      %p149 = scmp.ne.s32.totalorder %s137, %s138
      %p150 = scmp.eq.s32.totalorder %s39, 1
      %p151 = por %p149, %p150
      %p153 = scmp.ne.s32.totalorder %s138, %s152
      %p154 = scmp.eq.s32.totalorder %s39, 0
      %p155 = por %p153, %p154
      %s157 = sadd.s32 %s156, 1
      %p160 = scmp.eq.s32.totalorder %s33, 1
      %p161 = scmp.ne.s32.totalorder %s156, %s158
      %p162 = scmp.eq.s32.totalorder %s33, 0
      %p163 = por %p161, %p162
      %p164 = scmp.ne.s32.totalorder %s156, %s158
      %p165 = scmp.eq.s32.totalorder %s38, 1
      %p166 = por %p164, %p165
      %p167 = scmp.ne.s32.totalorder %s158, %s159
      %p168 = scmp.eq.s32.totalorder %s38, 0
      %p169 = por %p167, %p168
      %p170 = scmp.ne.s32.totalorder %s158, %s159
      %p171 = scmp.eq.s32.totalorder %s39, 1
      %p172 = por %p170, %p171
      %p174 = scmp.ne.s32.totalorder %s159, %s173
      %p175 = scmp.eq.s32.totalorder %s39, 0
      %p176 = por %p174, %p175
      %s178 = sadd.s32 %s177, 1
      %p181 = scmp.eq.s32.totalorder %s33, 1
      %p182 = scmp.ne.s32.totalorder %s177, %s179
      %p183 = scmp.eq.s32.totalorder %s33, 0
      %p184 = por %p182, %p183
      %p185 = scmp.ne.s32.totalorder %s177, %s179
      %p186 = scmp.eq.s32.totalorder %s38, 1
      %p187 = por %p185, %p186
      %p188 = scmp.ne.s32.totalorder %s179, %s180
      %p189 = scmp.eq.s32.totalorder %s38, 0
      %p190 = por %p188, %p189
      %p191 = scmp.ne.s32.totalorder %s179, %s180
      %p192 = scmp.eq.s32.totalorder %s39, 1
      %p193 = por %p191, %p192
      %p195 = scmp.ne.s32.totalorder %s180, %s194
      %p196 = scmp.eq.s32.totalorder %s39, 0
      %p197 = por %p195, %p196
      %s199 = sadd.s32 %s198, 1
      %p202 = scmp.eq.s32.totalorder %s33, 1
      %p203 = scmp.ne.s32.totalorder %s198, %s200
      %p204 = scmp.eq.s32.totalorder %s33, 0
      %p205 = por %p203, %p204
      %p206 = scmp.ne.s32.totalorder %s198, %s200
      %p207 = scmp.eq.s32.totalorder %s38, 1
      %p208 = por %p206, %p207
      %p209 = scmp.ne.s32.totalorder %s200, %s201
      %p210 = scmp.eq.s32.totalorder %s38, 0
      %p211 = por %p209, %p210
      %p212 = scmp.ne.s32.totalorder %s200, %s201
      %p213 = scmp.eq.s32.totalorder %s39, 1
      %p214 = por %p212, %p213
      %p216 = scmp.ne.s32.totalorder %s201, %s215
      %p217 = scmp.eq.s32.totalorder %s39, 0
      %p218 = por %p216, %p217
      %s220 = sadd.s32 %s219, 1
      %p223 = scmp.eq.s32.totalorder %s33, 1
      %p224 = scmp.ne.s32.totalorder %s219, %s221
      %p225 = scmp.eq.s32.totalorder %s33, 0
      %p226 = por %p224, %p225
      %p227 = scmp.ne.s32.totalorder %s219, %s221
      %p228 = scmp.eq.s32.totalorder %s38, 1
      %p229 = por %p227, %p228
      %p230 = scmp.ne.s32.totalorder %s221, %s222
      %p231 = scmp.eq.s32.totalorder %s38, 0
      %p232 = por %p230, %p231
      %p233 = scmp.ne.s32.totalorder %s221, %s222
      %p234 = scmp.eq.s32.totalorder %s39, 1
      %p235 = por %p233, %p234
      %p237 = scmp.ne.s32.totalorder %s222, %s236
      %p238 = scmp.eq.s32.totalorder %s39, 0
      %p239 = por %p237, %p238
      %s241 = sadd.s32 %s240, 1
      %p244 = scmp.eq.s32.totalorder %s33, 1
      %p245 = scmp.ne.s32.totalorder %s240, %s242
      %p246 = scmp.eq.s32.totalorder %s33, 0
      %p247 = por %p245, %p246
      %p248 = scmp.ne.s32.totalorder %s240, %s242
      %p249 = scmp.eq.s32.totalorder %s38, 1
      %p250 = por %p248, %p249
      %p251 = scmp.ne.s32.totalorder %s242, %s243
      %p252 = scmp.eq.s32.totalorder %s38, 0
      %p253 = por %p251, %p252
      %p254 = scmp.ne.s32.totalorder %s242, %s243
      %p255 = scmp.eq.s32.totalorder %s39, 1
      %p256 = por %p254, %p255
      %p258 = scmp.ne.s32.totalorder %s243, %s257
      %p259 = scmp.eq.s32.totalorder %s39, 0
      %p260 = por %p258, %p259
      %s262 = sadd.s32 %s261, 1
      %p265 = scmp.eq.s32.totalorder %s33, 1
      %p266 = scmp.ne.s32.totalorder %s261, %s263
      %p267 = scmp.eq.s32.totalorder %s33, 0
      %p268 = por %p266, %p267
      %p269 = scmp.ne.s32.totalorder %s261, %s263
      %p270 = scmp.eq.s32.totalorder %s38, 1
      %p271 = por %p269, %p270
      %p272 = scmp.ne.s32.totalorder %s263, %s264
      %p273 = scmp.eq.s32.totalorder %s38, 0
      %p274 = por %p272, %p273
      %p275 = scmp.ne.s32.totalorder %s263, %s264
      %p276 = scmp.eq.s32.totalorder %s39, 1
      %p277 = por %p275, %p276
      %p279 = scmp.ne.s32.totalorder %s264, %s278
      %p280 = scmp.eq.s32.totalorder %s39, 0
      %p281 = por %p279, %p280
      %s283 = sadd.s32 %s282, 1
      %p286 = scmp.eq.s32.totalorder %s33, 1
      %p287 = scmp.ne.s32.totalorder %s282, %s284
      %p288 = scmp.eq.s32.totalorder %s33, 0
      %p289 = por %p287, %p288
      %p290 = scmp.ne.s32.totalorder %s282, %s284
      %p291 = scmp.eq.s32.totalorder %s38, 1
      %p292 = por %p290, %p291
      %p293 = scmp.ne.s32.totalorder %s284, %s285
      %p294 = scmp.eq.s32.totalorder %s38, 0
      %p295 = por %p293, %p294
      %p296 = scmp.ne.s32.totalorder %s284, %s285
      %p297 = scmp.eq.s32.totalorder %s39, 1
      %p298 = por %p296, %p297
      %p300 = scmp.ne.s32.totalorder %s285, %s299
      %p301 = scmp.eq.s32.totalorder %s39, 0
      %p302 = por %p300, %p301
      %s304 = sadd.s32 %s303, 1
      %p307 = scmp.eq.s32.totalorder %s33, 1
      %p308 = scmp.ne.s32.totalorder %s303, %s305
      %p309 = scmp.eq.s32.totalorder %s33, 0
      %p310 = por %p308, %p309
      %p311 = scmp.ne.s32.totalorder %s303, %s305
      %p312 = scmp.eq.s32.totalorder %s38, 1
      %p313 = por %p311, %p312
      %p314 = scmp.ne.s32.totalorder %s305, %s306
      %p315 = scmp.eq.s32.totalorder %s38, 0
      %p316 = por %p314, %p315
      %p317 = scmp.ne.s32.totalorder %s305, %s306
      %p318 = scmp.eq.s32.totalorder %s39, 1
      %p319 = por %p317, %p318
      %p321 = scmp.ne.s32.totalorder %s306, %s320
      %p322 = scmp.eq.s32.totalorder %s39, 0
      %p323 = por %p321, %p322
      %s325 = sadd.s32 %s324, 1
      %p328 = scmp.eq.s32.totalorder %s33, 1
      %p329 = scmp.ne.s32.totalorder %s324, %s326
      %p330 = scmp.eq.s32.totalorder %s33, 0
      %p331 = por %p329, %p330
      %p332 = scmp.ne.s32.totalorder %s324, %s326
      %p333 = scmp.eq.s32.totalorder %s38, 1
      %p334 = por %p332, %p333
      %p335 = scmp.ne.s32.totalorder %s326, %s327
      %p336 = scmp.eq.s32.totalorder %s38, 0
      %p337 = por %p335, %p336
      %p338 = scmp.ne.s32.totalorder %s326, %s327
      %p339 = scmp.eq.s32.totalorder %s39, 1
      %p340 = por %p338, %p339
      %p342 = scmp.ne.s32.totalorder %s327, %s341
      %p343 = scmp.eq.s32.totalorder %s39, 0
      %p344 = por %p342, %p343
      %s346 = sadd.s32 %s345, 1
      %p349 = scmp.eq.s32.totalorder %s33, 1
      %p350 = scmp.ne.s32.totalorder %s345, %s347
      %p351 = scmp.eq.s32.totalorder %s33, 0
      %p352 = por %p350, %p351
      %p353 = scmp.ne.s32.totalorder %s345, %s347
      %p354 = scmp.eq.s32.totalorder %s38, 1
      %p355 = por %p353, %p354
      %p356 = scmp.ne.s32.totalorder %s347, %s348
      %p357 = scmp.eq.s32.totalorder %s38, 0
      %p358 = por %p356, %p357
      %p359 = scmp.ne.s32.totalorder %s347, %s348
      %p360 = scmp.eq.s32.totalorder %s39, 1
      %p361 = por %p359, %p360
      %p363 = scmp.ne.s32.totalorder %s348, %s362
      %p364 = scmp.eq.s32.totalorder %s39, 0
      %p365 = por %p363, %p364
      %s367 = sadd.s32 %s366, 1
      %p370 = scmp.eq.s32.totalorder %s33, 1
      %p371 = scmp.ne.s32.totalorder %s366, %s368
      %p372 = scmp.eq.s32.totalorder %s33, 0
      %p373 = por %p371, %p372
      %p374 = scmp.ne.s32.totalorder %s366, %s368
      %p375 = scmp.eq.s32.totalorder %s38, 1
      %p376 = por %p374, %p375
      %p377 = scmp.ne.s32.totalorder %s368, %s369
      %p378 = scmp.eq.s32.totalorder %s38, 0
      %p379 = por %p377, %p378
      %p380 = scmp.ne.s32.totalorder %s368, %s369
      %p381 = scmp.eq.s32.totalorder %s39, 1
      %p382 = por %p380, %p381
      %p384 = scmp.ne.s32.totalorder %s369, %s383
      %p385 = scmp.eq.s32.totalorder %s39, 0
      %p386 = por %p384, %p385
      %s388 = sadd.s32 %s387, 1
      %p391 = scmp.eq.s32.totalorder %s33, 1
      %p392 = scmp.ne.s32.totalorder %s387, %s389
      %p393 = scmp.eq.s32.totalorder %s33, 0
      %p394 = por %p392, %p393
      %p395 = scmp.ne.s32.totalorder %s387, %s389
      %p396 = scmp.eq.s32.totalorder %s38, 1
      %p397 = por %p395, %p396
      %p398 = scmp.ne.s32.totalorder %s389, %s390
      %p399 = scmp.eq.s32.totalorder %s38, 0
      %p400 = por %p398, %p399
      %p401 = scmp.ne.s32.totalorder %s389, %s390
      %p402 = scmp.eq.s32.totalorder %s39, 1
      %p403 = por %p401, %p402
      %p405 = scmp.ne.s32.totalorder %s390, %s404
      %p406 = scmp.eq.s32.totalorder %s39, 0
      %p407 = por %p405, %p406
      %s409 = sadd.s32 %s408, 1
      %p412 = scmp.eq.s32.totalorder %s33, 1
      %p413 = scmp.ne.s32.totalorder %s408, %s410
      %p414 = scmp.eq.s32.totalorder %s33, 0
      %p415 = por %p413, %p414
      %p416 = scmp.ne.s32.totalorder %s408, %s410
      %p417 = scmp.eq.s32.totalorder %s38, 1
      %p418 = por %p416, %p417
      %p419 = scmp.ne.s32.totalorder %s410, %s411
      %p420 = scmp.eq.s32.totalorder %s38, 0
      %p421 = por %p419, %p420
      %p422 = scmp.ne.s32.totalorder %s410, %s411
      %p423 = scmp.eq.s32.totalorder %s39, 1
      %p424 = por %p422, %p423
      %p426 = scmp.ne.s32.totalorder %s411, %s425
      %p427 = scmp.eq.s32.totalorder %s39, 0
      %p428 = por %p426, %p427
      %s430 = sadd.s32 %s429, 1
      %p433 = scmp.eq.s32.totalorder %s33, 1
      %p434 = scmp.ne.s32.totalorder %s429, %s431
      %p435 = scmp.eq.s32.totalorder %s33, 0
      %p436 = por %p434, %p435
      %p437 = scmp.ne.s32.totalorder %s429, %s431
      %p438 = scmp.eq.s32.totalorder %s38, 1
      %p439 = por %p437, %p438
      %p440 = scmp.ne.s32.totalorder %s431, %s432
      %p441 = scmp.eq.s32.totalorder %s38, 0
      %p442 = por %p440, %p441
      %p443 = scmp.ne.s32.totalorder %s431, %s432
      %p444 = scmp.eq.s32.totalorder %s39, 1
      %p445 = por %p443, %p444
      %p447 = scmp.ne.s32.totalorder %s432, %s446
      %p448 = scmp.eq.s32.totalorder %s39, 0
      %p449 = por %p447, %p448
      %s451 = sadd.s32 %s450, 1
      %p454 = scmp.eq.s32.totalorder %s33, 1
      %p455 = scmp.ne.s32.totalorder %s450, %s452
      %p456 = scmp.eq.s32.totalorder %s33, 0
      %p457 = por %p455, %p456
      %p458 = scmp.ne.s32.totalorder %s450, %s452
      %p459 = scmp.eq.s32.totalorder %s38, 1
      %p460 = por %p458, %p459
      %p461 = scmp.ne.s32.totalorder %s452, %s453
      %p462 = scmp.eq.s32.totalorder %s38, 0
      %p463 = por %p461, %p462
      %p464 = scmp.ne.s32.totalorder %s452, %s453
      %p465 = scmp.eq.s32.totalorder %s39, 1
      %p466 = por %p464, %p465
      %p468 = scmp.ne.s32.totalorder %s453, %s467
      %p469 = scmp.eq.s32.totalorder %s39, 0
      %p470 = por %p468, %p469
      %s472 = sadd.s32 %s471, 1
      %p475 = scmp.eq.s32.totalorder %s33, 1
      %p476 = scmp.ne.s32.totalorder %s471, %s473
      %p477 = scmp.eq.s32.totalorder %s33, 0
      %p478 = por %p476, %p477
      %p479 = scmp.ne.s32.totalorder %s471, %s473
      %p480 = scmp.eq.s32.totalorder %s38, 1
      %p481 = por %p479, %p480
      %p482 = scmp.ne.s32.totalorder %s473, %s474
      %p483 = scmp.eq.s32.totalorder %s38, 0
      %p484 = por %p482, %p483
      %p485 = scmp.ne.s32.totalorder %s473, %s474
      %p486 = scmp.eq.s32.totalorder %s39, 1
      %p487 = por %p485, %p486
      %p489 = scmp.ne.s32.totalorder %s474, %s488
      %p490 = scmp.eq.s32.totalorder %s39, 0
      %p491 = por %p489, %p490
      %s493 = sadd.s32 %s492, 1
      %p496 = scmp.eq.s32.totalorder %s33, 1
      %p497 = scmp.ne.s32.totalorder %s492, %s494
      %p498 = scmp.eq.s32.totalorder %s33, 0
      %p499 = por %p497, %p498
      %p500 = scmp.ne.s32.totalorder %s492, %s494
      %p501 = scmp.eq.s32.totalorder %s38, 1
      %p502 = por %p500, %p501
      %p503 = scmp.ne.s32.totalorder %s494, %s495
      %p504 = scmp.eq.s32.totalorder %s38, 0
      %p505 = por %p503, %p504
      %p506 = scmp.ne.s32.totalorder %s494, %s495
      %p507 = scmp.eq.s32.totalorder %s39, 1
      %p508 = por %p506, %p507
      %p510 = scmp.ne.s32.totalorder %s495, %s509
      %p511 = scmp.eq.s32.totalorder %s39, 0
      %p512 = por %p510, %p511
      %s513 = ssub.s32 %s33, %s40
      %p514 = scmp.eq.s32.totalorder %s513, 0
      %s516 = sadd.s32 %s515, 1
      %s517 = scalar_select %p514, %s515, %s516
      %p520 = pneg %p514
      %p521 = scmp.eq.s32.totalorder %s33, 1
      %p522 = por %p520, %p521
      %p523 = scmp.ne.s32.totalorder %s515, %s518
      %p524 = scmp.eq.s32.totalorder %s33, 0
      %p525 = por %p523, %p524
      %p526 = scmp.ne.s32.totalorder %s515, %s518
      %p527 = scmp.eq.s32.totalorder %s38, 1
      %p528 = por %p526, %p527
      %p529 = scmp.ne.s32.totalorder %s518, %s519
      %p530 = scmp.eq.s32.totalorder %s38, 0
      %p531 = por %p529, %p530
      %p532 = scmp.ne.s32.totalorder %s518, %s519
      %p533 = scmp.eq.s32.totalorder %s39, 1
      %p534 = por %p532, %p533
      %p536 = scmp.ne.s32.totalorder %s519, %s535
      %p537 = scmp.eq.s32.totalorder %s39, 0
      %p538 = por %p536, %p537
      %p539 = scmp.le.s32.totalorder 1, %s33
      %p540 = scmp.lt.s32.totalorder %s33, 3
      %p541 = pnand %p539, %p540
      %p542 = pneg %p541
      // Predicated region
      $region9: #{tpu_custom_call.1} parent=5 // pred_check
        _
      $region10: #{tpu_custom_call.1} parent=5 // pred_check_branch
        %544 = sbr.rel (%p541) target = $region12
      $region11: #{tpu_custom_call.1} parent=5 // pred_region
        %s545 = ssub.s32 %s33, 1
        // Predicated region
        $region13: #{tpu_custom_call.1} parent=11 // pred_check
          %p546 = pneg %p106
        $region14: #{tpu_custom_call.1} parent=11 // pred_check_branch
          %548 = sbr.rel (%p546) target = $region16
        $region15: #{tpu_custom_call.1} parent=11 // pred_region
          _
        $region16: #{tpu_custom_call.1} parent=11 // pred_fallthru
          _
        // Predicated region
        $region17: #{tpu_custom_call.1} parent=11 // pred_check
          %p549 = pneg %p127
        $region18: #{tpu_custom_call.1} parent=11 // pred_check_branch
          %551 = sbr.rel (%p549) target = $region20
        $region19: #{tpu_custom_call.1} parent=11 // pred_region
          _
        $region20: #{tpu_custom_call.1} parent=11 // pred_fallthru
          _
        // Predicated region
        $region21: #{tpu_custom_call.1} parent=11 // pred_check
          %p552 = pneg %p148
        $region22: #{tpu_custom_call.1} parent=11 // pred_check_branch
          %554 = sbr.rel (%p552) target = $region24
        $region23: #{tpu_custom_call.1} parent=11 // pred_region
          _
        $region24: #{tpu_custom_call.1} parent=11 // pred_fallthru
          _
        // Predicated region
        $region25: #{tpu_custom_call.1} parent=11 // pred_check
          %p555 = pneg %p169
        $region26: #{tpu_custom_call.1} parent=11 // pred_check_branch
          %557 = sbr.rel (%p555) target = $region28
        $region27: #{tpu_custom_call.1} parent=11 // pred_region
          _
        $region28: #{tpu_custom_call.1} parent=11 // pred_fallthru
          _
        // Predicated region
        $region29: #{tpu_custom_call.1} parent=11 // pred_check
          %p558 = pneg %p190
        $region30: #{tpu_custom_call.1} parent=11 // pred_check_branch
          %560 = sbr.rel (%p558) target = $region32
        $region31: #{tpu_custom_call.1} parent=11 // pred_region
          _
        $region32: #{tpu_custom_call.1} parent=11 // pred_fallthru
          _
        // Predicated region
        $region33: #{tpu_custom_call.1} parent=11 // pred_check
          %p561 = pneg %p211
        $region34: #{tpu_custom_call.1} parent=11 // pred_check_branch
          %563 = sbr.rel (%p561) target = $region36
        $region35: #{tpu_custom_call.1} parent=11 // pred_region
          _
        $region36: #{tpu_custom_call.1} parent=11 // pred_fallthru
          _
        // Predicated region
        $region37: #{tpu_custom_call.1} parent=11 // pred_check
          %p564 = pneg %p232
        $region38: #{tpu_custom_call.1} parent=11 // pred_check_branch
          %566 = sbr.rel (%p564) target = $region40
        $region39: #{tpu_custom_call.1} parent=11 // pred_region
          _
        $region40: #{tpu_custom_call.1} parent=11 // pred_fallthru
          _
        // Predicated region
        $region41: #{tpu_custom_call.1} parent=11 // pred_check
          %p567 = pneg %p253
        $region42: #{tpu_custom_call.1} parent=11 // pred_check_branch
          %569 = sbr.rel (%p567) target = $region44
        $region43: #{tpu_custom_call.1} parent=11 // pred_region
          _
        $region44: #{tpu_custom_call.1} parent=11 // pred_fallthru
          _
        // Predicated region
        $region45: #{tpu_custom_call.1} parent=11 // pred_check
          %p570 = pneg %p274
        $region46: #{tpu_custom_call.1} parent=11 // pred_check_branch
          %572 = sbr.rel (%p570) target = $region48
        $region47: #{tpu_custom_call.1} parent=11 // pred_region
          _
        $region48: #{tpu_custom_call.1} parent=11 // pred_fallthru
          _
        // Predicated region
        $region49: #{tpu_custom_call.1} parent=11 // pred_check
          %p573 = pneg %p295
        $region50: #{tpu_custom_call.1} parent=11 // pred_check_branch
          %575 = sbr.rel (%p573) target = $region52
        $region51: #{tpu_custom_call.1} parent=11 // pred_region
          _
        $region52: #{tpu_custom_call.1} parent=11 // pred_fallthru
          _
        // Predicated region
        $region53: #{tpu_custom_call.1} parent=11 // pred_check
          %p576 = pneg %p316
        $region54: #{tpu_custom_call.1} parent=11 // pred_check_branch
          %578 = sbr.rel (%p576) target = $region56
        $region55: #{tpu_custom_call.1} parent=11 // pred_region
          _
        $region56: #{tpu_custom_call.1} parent=11 // pred_fallthru
          _
        // Predicated region
        $region57: #{tpu_custom_call.1} parent=11 // pred_check
          %p579 = pneg %p337
        $region58: #{tpu_custom_call.1} parent=11 // pred_check_branch
          %581 = sbr.rel (%p579) target = $region60
        $region59: #{tpu_custom_call.1} parent=11 // pred_region
          _
        $region60: #{tpu_custom_call.1} parent=11 // pred_fallthru
          _
        // Predicated region
        $region61: #{tpu_custom_call.1} parent=11 // pred_check
          %p582 = pneg %p358
        $region62: #{tpu_custom_call.1} parent=11 // pred_check_branch
          %584 = sbr.rel (%p582) target = $region64
        $region63: #{tpu_custom_call.1} parent=11 // pred_region
          _
        $region64: #{tpu_custom_call.1} parent=11 // pred_fallthru
          _
        // Predicated region
        $region65: #{tpu_custom_call.1} parent=11 // pred_check
          %p585 = pneg %p379
        $region66: #{tpu_custom_call.1} parent=11 // pred_check_branch
          %587 = sbr.rel (%p585) target = $region68
        $region67: #{tpu_custom_call.1} parent=11 // pred_region
          _
        $region68: #{tpu_custom_call.1} parent=11 // pred_fallthru
          _
        // Predicated region
        $region69: #{tpu_custom_call.1} parent=11 // pred_check
          %p588 = pneg %p400
        $region70: #{tpu_custom_call.1} parent=11 // pred_check_branch
          %590 = sbr.rel (%p588) target = $region72
        $region71: #{tpu_custom_call.1} parent=11 // pred_region
          _
        $region72: #{tpu_custom_call.1} parent=11 // pred_fallthru
          _
        // Predicated region
        $region73: #{tpu_custom_call.1} parent=11 // pred_check
          %p591 = pneg %p421
        $region74: #{tpu_custom_call.1} parent=11 // pred_check_branch
          %593 = sbr.rel (%p591) target = $region76
        $region75: #{tpu_custom_call.1} parent=11 // pred_region
          _
        $region76: #{tpu_custom_call.1} parent=11 // pred_fallthru
          _
        // Predicated region
        $region77: #{tpu_custom_call.1} parent=11 // pred_check
          %p594 = pneg %p442
        $region78: #{tpu_custom_call.1} parent=11 // pred_check_branch
          %596 = sbr.rel (%p594) target = $region80
        $region79: #{tpu_custom_call.1} parent=11 // pred_region
          _
        $region80: #{tpu_custom_call.1} parent=11 // pred_fallthru
          _
        // Predicated region
        $region81: #{tpu_custom_call.1} parent=11 // pred_check
          %p597 = pneg %p463
        $region82: #{tpu_custom_call.1} parent=11 // pred_check_branch
          %599 = sbr.rel (%p597) target = $region84
        $region83: #{tpu_custom_call.1} parent=11 // pred_region
          _
        $region84: #{tpu_custom_call.1} parent=11 // pred_fallthru
          _
        // Predicated region
        $region85: #{tpu_custom_call.1} parent=11 // pred_check
          %p600 = pneg %p484
        $region86: #{tpu_custom_call.1} parent=11 // pred_check_branch
          %602 = sbr.rel (%p600) target = $region88
        $region87: #{tpu_custom_call.1} parent=11 // pred_region
          _
        $region88: #{tpu_custom_call.1} parent=11 // pred_fallthru
          _
        // Predicated region
        $region89: #{tpu_custom_call.1} parent=11 // pred_check
          %p603 = pneg %p505
        $region90: #{tpu_custom_call.1} parent=11 // pred_check_branch
          %605 = sbr.rel (%p603) target = $region92
        $region91: #{tpu_custom_call.1} parent=11 // pred_region
          _
        $region92: #{tpu_custom_call.1} parent=11 // pred_fallthru
          _
      $region12: #{tpu_custom_call.1} parent=5 // pred_fallthru
        _
      %p606 = scmp.lt.s32.totalorder %s33, 2
      // Predicated region
      $region93: #{tpu_custom_call.1} parent=5 // pred_check
        %p607 = pneg %p606
      $region94: #{tpu_custom_call.1} parent=5 // pred_check_branch
        %609 = sbr.rel (%p607) target = $region96
      $region95: #{tpu_custom_call.1} parent=5 // pred_region
        // Predicated region
        $region97: #{tpu_custom_call.1} parent=95 // pred_check
          %p610 = pneg %p53
        $region98: #{tpu_custom_call.1} parent=95 // pred_check_branch
          %612 = sbr.rel (%p610) target = $region100
        $region99: #{tpu_custom_call.1} parent=95 // pred_region
          %p613 = scmp.lt.s32.totalorder %s33, 1
          %s614 = scalar_select %p613, %s33, 1
          %s615 = smul.addr %s614, 8
          %s616 = scalar_lea.vmem %s1, %s615
        $region100: #{tpu_custom_call.1} parent=95 // pred_fallthru
          _
        // Predicated region
        $region101: #{tpu_custom_call.1} parent=95 // pred_check
          %p617 = pneg %p79
        $region102: #{tpu_custom_call.1} parent=95 // pred_check_branch
          %619 = sbr.rel (%p617) target = $region104
        $region103: #{tpu_custom_call.1} parent=95 // pred_region
          %p620 = scmp.lt.s32.totalorder %s33, 1
          %s621 = scalar_select %p620, %s33, 1
          %s622 = scalar_lea.vmem %s2, %s621
        $region104: #{tpu_custom_call.1} parent=95 // pred_fallthru
          _
      $region96: #{tpu_custom_call.1} parent=5 // pred_fallthru
        _
      %p623 = scmp.le.s32.totalorder 1, %s33
      %p624 = scmp.lt.s32.totalorder %s33, 3
      %p625 = pnand %p623, %p624
      %p626 = pneg %p625
      // Predicated region
      $region105: #{tpu_custom_call.1} parent=5 // pred_check
        _
      $region106: #{tpu_custom_call.1} parent=5 // pred_check_branch
        %628 = sbr.rel (%p625) target = $region108
      $region107: #{tpu_custom_call.1} parent=5 // pred_region
        %s629 = ssub.s32 %s33, 1
        %p630 = scmp.lt.s32.totalorder %s38, 1
        %s631 = scalar_select %p630, %s38, 1
        %s632 = smul.addr %s631, 8
        %s633 = scalar_lea.vmem %s1, %s632
        %p634 = pneg %p59
        %p635 = pneg %p56
        %p636 = scmp.lt.s32.totalorder %s38, 1
        %s637 = scalar_select %p636, %s38, 1
        %s638 = scalar_lea.vmem %s2, %s637
        %p639 = pneg %p85
        %p640 = pneg %p82
        %p641 = pneg %p106
        %p642 = pneg %p103
        %p643 = pneg %p127
        %p644 = pneg %p124
        %p645 = pneg %p148
        %p646 = pneg %p145
        %p647 = pneg %p169
        %p648 = pneg %p166
        %p649 = pneg %p190
        %p650 = pneg %p187
        %p651 = pneg %p211
        %p652 = pneg %p208
        %p653 = pneg %p232
        %p654 = pneg %p229
        %p655 = pneg %p253
        %p656 = pneg %p250
        %p657 = pneg %p274
        %p658 = pneg %p271
        %p659 = pneg %p295
        %p660 = pneg %p292
        %p661 = pneg %p316
        %p662 = pneg %p313
        %p663 = pneg %p337
        %p664 = pneg %p334
        %p665 = pneg %p358
        %p666 = pneg %p355
        %p667 = pneg %p379
        %p668 = pneg %p376
        %p669 = pneg %p400
        %p670 = pneg %p397
        %p671 = pneg %p421
        %p672 = pneg %p418
        %p673 = pneg %p442
        %p674 = pneg %p439
        %p675 = pneg %p463
        %p676 = pneg %p460
        %p677 = pneg %p484
        %p678 = pneg %p481
        %p679 = pneg %p505
        %p680 = pneg %p502
        %p681 = pneg %p531
        %p682 = pneg %p528
        %s683 = sand.u32 %s518, 1
        %s684 = scalar_lea.sflag [#allocation5], %s683
        %s685 = sand.u32 %s518, 1
        %s686 = smul.addr %s685, 8
        %s687 = scalar_lea.vmem [#allocation4], %s686
        %p688 = scmp.lt.s32.totalorder %s38, 1
        %s689 = scalar_select %p688, %s38, 1
        %s690 = smul.addr %s689, 8
        %s691 = scalar_lea.vmem %s1, %s690
        %p692 = scmp.lt.s32.totalorder %s38, 1
        %s693 = scalar_select %p692, %s38, 1
        %s694 = scalar_lea.vmem %s2, %s693
        %v696 = vld [vmem:[%s691] sm:$0xff]
        %v697 = vld [vmem:[%s694] sm:$0x1]
        %v698 = vld [vmem:[%s3] sm:$0x1]
        %v699 = vld [vmem:[%s4] sm:$0x1]
        %vm700 = vcmask 261120
        %v701 = vsel %vm700, %v696, 0.0
        %702 = vadd.xlane.f32.xlu0 %v701
        %v703 = vpop.xlane.xlu0 %702
        %v704 = vrcp.pop 32.0
        %v705 = vmul.f32 %v703, %v704
        %v706 = vsub.f32 %v696, %v705
        %v707 = vmul.f32 %v706, %v706
        %v708 = vsel %vm700, %v707, 0.0
        %709 = vadd.xlane.f32.xlu0 %v708
        %v710 = vpop.xlane.xlu0 %709
        %v711 = vmul.f32 %v710, %v704
        %v712 = vadd.f32 %v711, 1e-12
        %v713 = vrsqrt.pop %v712
        %v714 = vmul.f32 %v706, %v713
        %v716 = vlaneseq
        %v717 = vshrl.u32 %v716, 7
        %v718 = vsub.s32 0, %v717
        %v719 = vrot.slane %v698, %v718
        %v721 = vmul.f32 %v714, %v719
        %v723 = vlaneseq
        %v724 = vshrl.u32 %v723, 7
        %v725 = vsub.s32 0, %v724
        %v726 = vrot.slane %v699, %v725
        %v728 = vadd.f32 %v721, %v726
        %v729 = vpack.c.bf16 %v728, %v728
        %v730 = vld [vmem:[%s5] sm:$0xf]
        %v731 = vld [vmem:[%s5 + $0x4] sm:$0xf]
        %v732 = vld [vmem:[%s5 + $0x8] sm:$0xf]
        %v733 = vld [vmem:[%s5 + $0xc] sm:$0xf]
        %v734 = vld [vmem:[%s5 + $0x10] sm:$0xf]
        %v735 = vld [vmem:[%s5 + $0x14] sm:$0xf]
        %v736 = vld [vmem:[%s5 + $0x18] sm:$0xf]
        %v737 = vld [vmem:[%s5 + $0x1c] sm:$0xf]
        %v738 = vld [vmem:[%s5 + $0x20] sm:$0xf]
        %v739 = vld [vmem:[%s5 + $0x24] sm:$0xf]
        %v740 = vld [vmem:[%s5 + $0x28] sm:$0xf]
        %v741 = vld [vmem:[%s5 + $0x2c] sm:$0xf]
        %v742 = vld [vmem:[%s5 + $0x30] sm:$0xf]
        %v743 = vld [vmem:[%s5 + $0x34] sm:$0xf]
        %v744 = vld [vmem:[%s5 + $0x38] sm:$0xf]
        %v745 = vld [vmem:[%s5 + $0x3c] sm:$0xf]
        %v746 = vld [vmem:[%s6] sm:$0x1]
        %v747 = vld [vmem:[%s6 + $0x1] sm:$0x1]
        %v748 = vld [vmem:[%s6 + $0x2] sm:$0x1]
        %v749 = vld [vmem:[%s6 + $0x3] sm:$0x1]
        %v754 = vlaneseq
        %v755 = vshrl.u32 %v754, 7
        %v756 = vsub.s32 0, %v755
        %v757 = vrot.slane %v746, %v756
        %v758 = vlaneseq
        %v759 = vshrl.u32 %v758, 7
        %v760 = vsub.s32 0, %v759
        %v761 = vrot.slane %v747, %v760
        %v762 = vlaneseq
        %v763 = vshrl.u32 %v762, 7
        %v764 = vsub.s32 0, %v763
        %v765 = vrot.slane %v748, %v764
        %v766 = vlaneseq
        %v767 = vshrl.u32 %v766, 7
        %v768 = vsub.s32 0, %v767
        %v769 = vrot.slane %v749, %v768
        %v778 = vunpack.c.l.b16 %v730
        %v779 = vunpack.c.l.b16 %v731
        %v780 = vunpack.c.l.b16 %v732
        %v781 = vunpack.c.l.b16 %v733
        %v782 = vpack.c.b16 %v779, %v778
        %v783 = vpack.c.b16 %v781, %v780
        %v787 = vsel %vm700, %v729, 0
        %789 = vmatprep.subr.bf16.mxu0 0
        %790 = vmatpush1.bf16.msra.mxu0 %v782
        %791 = vmatprep.subr.bf16.mxu0 0
        %792 = vmatpush1.bf16.msra.mxu0 %v783
        %793 = vmatprep.subr.bf16.mxu0 0
        %794 = vmatpush1.bf16.msra.mxu0 0
        %795 = vmatprep.subr.bf16.mxu0 0
        %796 = vmatpush1.bf16.msra.mxu0 0
        %797 = vmatprep.subr.bf16.mxu0 0
        %798 = vmatpush1.bf16.msra.mxu0 0
        %799 = vmatprep.subr.bf16.mxu0 0
        %800 = vmatpush1.bf16.msra.mxu0 0
        %801 = vmatprep.subr.bf16.mxu0 0
        %802 = vmatpush1.bf16.msra.mxu0 0
        %803 = vmatprep.subr.bf16.mxu0 0
        %804 = vmatpush1.bf16.msra.mxu0 0
        %805 = vmatprep.subr.bf16.mxu0 0
        %806 = vmatpush1.bf16.msra.mxu0 0
        %807 = vmatprep.subr.bf16.mxu0 0
        %808 = vmatpush1.bf16.msra.mxu0 0
        %809 = vmatprep.subr.bf16.mxu0 0
        %810 = vmatpush1.bf16.msra.mxu0 0
        %811 = vmatprep.subr.bf16.mxu0 0
        %812 = vmatpush1.bf16.msra.mxu0 0
        %813 = vmatprep.subr.bf16.mxu0 0
        %814 = vmatpush1.bf16.msra.mxu0 0
        %815 = vmatprep.subr.bf16.mxu0 0
        %816 = vmatpush1.bf16.msra.mxu0 0
        %817 = vmatprep.subr.bf16.mxu0 0
        %818 = vmatpush1.bf16.msra.mxu0 0
        %819 = vmatprep.subr.bf16.mxu0 0
        %820 = vmatpush1.bf16.msra.mxu0 0
        %821 = vmatprep.mubr.bf16.mxu0 0
        %822 = vmatmul.mubr.bf16.gmra.mrb[0].mxu0 %v787
        %v823 = vpop.f32.mrb[0].mxu0
        %v824 = vadd.f32 %v757, %v823
        %v825 = vpop.f32.mrb[0].mxu0
        %v826 = vpop.f32.mrb[0].mxu0
        %v827 = vpop.f32.mrb[0].mxu0
        %828 = vdwg.mxu0
        %v833 = vunpack.c.l.b16 %v734
        %v834 = vunpack.c.l.b16 %v735
        %v835 = vunpack.c.l.b16 %v736
        %v836 = vunpack.c.l.b16 %v737
        %v837 = vpack.c.b16 %v834, %v833
        %v838 = vpack.c.b16 %v836, %v835
        %841 = vmatprep.subr.bf16.mxu0 0
        %842 = vmatpush1.bf16.msra.mxu0 %v837
        %843 = vmatprep.subr.bf16.mxu0 0
        %844 = vmatpush1.bf16.msra.mxu0 %v838
        %845 = vmatprep.subr.bf16.mxu0 0
        %846 = vmatpush1.bf16.msra.mxu0 0
        %847 = vmatprep.subr.bf16.mxu0 0
        %848 = vmatpush1.bf16.msra.mxu0 0
        %849 = vmatprep.subr.bf16.mxu0 0
        %850 = vmatpush1.bf16.msra.mxu0 0
        %851 = vmatprep.subr.bf16.mxu0 0
        %852 = vmatpush1.bf16.msra.mxu0 0
        %853 = vmatprep.subr.bf16.mxu0 0
        %854 = vmatpush1.bf16.msra.mxu0 0
        %855 = vmatprep.subr.bf16.mxu0 0
        %856 = vmatpush1.bf16.msra.mxu0 0
        %857 = vmatprep.subr.bf16.mxu0 0
        %858 = vmatpush1.bf16.msra.mxu0 0
        %859 = vmatprep.subr.bf16.mxu0 0
        %860 = vmatpush1.bf16.msra.mxu0 0
        %861 = vmatprep.subr.bf16.mxu0 0
        %862 = vmatpush1.bf16.msra.mxu0 0
        %863 = vmatprep.subr.bf16.mxu0 0
        %864 = vmatpush1.bf16.msra.mxu0 0
        %865 = vmatprep.subr.bf16.mxu0 0
        %866 = vmatpush1.bf16.msra.mxu0 0
        %867 = vmatprep.subr.bf16.mxu0 0
        %868 = vmatpush1.bf16.msra.mxu0 0
        %869 = vmatprep.subr.bf16.mxu0 0
        %870 = vmatpush1.bf16.msra.mxu0 0
        %871 = vmatprep.subr.bf16.mxu0 0
        %872 = vmatpush1.bf16.msra.mxu0 0
        %873 = vmatprep.mubr.bf16.mxu0 0
        %874 = vmatmul.mubr.bf16.gmra.mrb[0].mxu0 %v787
        %v875 = vpop.f32.mrb[0].mxu0
        %v876 = vadd.f32 %v761, %v875
        %v877 = vpop.f32.mrb[0].mxu0
        %v878 = vpop.f32.mrb[0].mxu0
        %v879 = vpop.f32.mrb[0].mxu0
        %880 = vdwg.mxu0
        %v885 = vunpack.c.l.b16 %v738
        %v886 = vunpack.c.l.b16 %v739
        %v887 = vunpack.c.l.b16 %v740
        %v888 = vunpack.c.l.b16 %v741
        %v889 = vpack.c.b16 %v886, %v885
        %v890 = vpack.c.b16 %v888, %v887
        %893 = vmatprep.subr.bf16.mxu0 0
        %894 = vmatpush1.bf16.msra.mxu0 %v889
        %895 = vmatprep.subr.bf16.mxu0 0
        %896 = vmatpush1.bf16.msra.mxu0 %v890
        %897 = vmatprep.subr.bf16.mxu0 0
        %898 = vmatpush1.bf16.msra.mxu0 0
        %899 = vmatprep.subr.bf16.mxu0 0
        %900 = vmatpush1.bf16.msra.mxu0 0
        %901 = vmatprep.subr.bf16.mxu0 0
        %902 = vmatpush1.bf16.msra.mxu0 0
        %903 = vmatprep.subr.bf16.mxu0 0
        %904 = vmatpush1.bf16.msra.mxu0 0
        %905 = vmatprep.subr.bf16.mxu0 0
        %906 = vmatpush1.bf16.msra.mxu0 0
        %907 = vmatprep.subr.bf16.mxu0 0
        %908 = vmatpush1.bf16.msra.mxu0 0
        %909 = vmatprep.subr.bf16.mxu0 0
        %910 = vmatpush1.bf16.msra.mxu0 0
        %911 = vmatprep.subr.bf16.mxu0 0
        %912 = vmatpush1.bf16.msra.mxu0 0
        %913 = vmatprep.subr.bf16.mxu0 0
        %914 = vmatpush1.bf16.msra.mxu0 0
        %915 = vmatprep.subr.bf16.mxu0 0
        %916 = vmatpush1.bf16.msra.mxu0 0
        %917 = vmatprep.subr.bf16.mxu0 0
        %918 = vmatpush1.bf16.msra.mxu0 0
        %919 = vmatprep.subr.bf16.mxu0 0
        %920 = vmatpush1.bf16.msra.mxu0 0
        %921 = vmatprep.subr.bf16.mxu0 0
        %922 = vmatpush1.bf16.msra.mxu0 0
        %923 = vmatprep.subr.bf16.mxu0 0
        %924 = vmatpush1.bf16.msra.mxu0 0
        %925 = vmatprep.mubr.bf16.mxu0 0
        %926 = vmatmul.mubr.bf16.gmra.mrb[0].mxu0 %v787
        %v927 = vpop.f32.mrb[0].mxu0
        %v928 = vadd.f32 %v765, %v927
        %v929 = vpop.f32.mrb[0].mxu0
        %v930 = vpop.f32.mrb[0].mxu0
        %v931 = vpop.f32.mrb[0].mxu0
        %932 = vdwg.mxu0
        %v937 = vunpack.c.l.b16 %v742
        %v938 = vunpack.c.l.b16 %v743
        %v939 = vunpack.c.l.b16 %v744
        %v940 = vunpack.c.l.b16 %v745
        %v941 = vpack.c.b16 %v938, %v937
        %v942 = vpack.c.b16 %v940, %v939
        %945 = vmatprep.subr.bf16.mxu0 0
        %946 = vmatpush1.bf16.msra.mxu0 %v941
        %947 = vmatprep.subr.bf16.mxu0 0
        %948 = vmatpush1.bf16.msra.mxu0 %v942
        %949 = vmatprep.subr.bf16.mxu0 0
        %950 = vmatpush1.bf16.msra.mxu0 0
        %951 = vmatprep.subr.bf16.mxu0 0
        %952 = vmatpush1.bf16.msra.mxu0 0
        %953 = vmatprep.subr.bf16.mxu0 0
        %954 = vmatpush1.bf16.msra.mxu0 0
        %955 = vmatprep.subr.bf16.mxu0 0
        %956 = vmatpush1.bf16.msra.mxu0 0
        %957 = vmatprep.subr.bf16.mxu0 0
        %958 = vmatpush1.bf16.msra.mxu0 0
        %959 = vmatprep.subr.bf16.mxu0 0
        %960 = vmatpush1.bf16.msra.mxu0 0
        %961 = vmatprep.subr.bf16.mxu0 0
        %962 = vmatpush1.bf16.msra.mxu0 0
        %963 = vmatprep.subr.bf16.mxu0 0
        %964 = vmatpush1.bf16.msra.mxu0 0
        %965 = vmatprep.subr.bf16.mxu0 0
        %966 = vmatpush1.bf16.msra.mxu0 0
        %967 = vmatprep.subr.bf16.mxu0 0
        %968 = vmatpush1.bf16.msra.mxu0 0
        %969 = vmatprep.subr.bf16.mxu0 0
        %970 = vmatpush1.bf16.msra.mxu0 0
        %971 = vmatprep.subr.bf16.mxu0 0
        %972 = vmatpush1.bf16.msra.mxu0 0
        %973 = vmatprep.subr.bf16.mxu0 0
        %974 = vmatpush1.bf16.msra.mxu0 0
        %975 = vmatprep.subr.bf16.mxu0 0
        %976 = vmatpush1.bf16.msra.mxu0 0
        %977 = vmatprep.mubr.bf16.mxu0 0
        %978 = vmatmul.mubr.bf16.gmra.mrb[0].mxu0 %v787
        %v979 = vpop.f32.mrb[0].mxu0
        %v980 = vadd.f32 %v769, %v979
        %v981 = vpop.f32.mrb[0].mxu0
        %v982 = vpop.f32.mrb[0].mxu0
        %v983 = vpop.f32.mrb[0].mxu0
        %984 = vdwg.mxu0
        %v985 = vld [vmem:[%s7] sm:$0xf]
        %v986 = vld [vmem:[%s7 + $0x4] sm:$0xf]
        %v987 = vld [vmem:[%s7 + $0x8] sm:$0xf]
        %v988 = vld [vmem:[%s7 + $0xc] sm:$0xf]
        %v989 = vld [vmem:[%s7 + $0x10] sm:$0xf]
        %v990 = vld [vmem:[%s7 + $0x14] sm:$0xf]
        %v991 = vld [vmem:[%s7 + $0x18] sm:$0xf]
        %v992 = vld [vmem:[%s7 + $0x1c] sm:$0xf]
        %v993 = vld [vmem:[%s7 + $0x20] sm:$0xf]
        %v994 = vld [vmem:[%s7 + $0x24] sm:$0xf]
        %v995 = vld [vmem:[%s7 + $0x28] sm:$0xf]
        %v996 = vld [vmem:[%s7 + $0x2c] sm:$0xf]
        %v997 = vld [vmem:[%s7 + $0x30] sm:$0xf]
        %v998 = vld [vmem:[%s7 + $0x34] sm:$0xf]
        %v999 = vld [vmem:[%s7 + $0x38] sm:$0xf]
        %v1000 = vld [vmem:[%s7 + $0x3c] sm:$0xf]
        %v1001 = vld [vmem:[%s8] sm:$0x1]
        %v1002 = vld [vmem:[%s8 + $0x1] sm:$0x1]
        %v1003 = vld [vmem:[%s8 + $0x2] sm:$0x1]
        %v1004 = vld [vmem:[%s8 + $0x3] sm:$0x1]
        %v1009 = vlaneseq
        %v1010 = vshrl.u32 %v1009, 7
        %v1011 = vsub.s32 0, %v1010
        %v1012 = vrot.slane %v1001, %v1011
        %v1013 = vlaneseq
        %v1014 = vshrl.u32 %v1013, 7
        %v1015 = vsub.s32 0, %v1014
        %v1016 = vrot.slane %v1002, %v1015
        %v1017 = vlaneseq
        %v1018 = vshrl.u32 %v1017, 7
        %v1019 = vsub.s32 0, %v1018
        %v1020 = vrot.slane %v1003, %v1019
        %v1021 = vlaneseq
        %v1022 = vshrl.u32 %v1021, 7
        %v1023 = vsub.s32 0, %v1022
        %v1024 = vrot.slane %v1004, %v1023
        %v1033 = vunpack.c.l.b16 %v985
        %v1034 = vunpack.c.l.b16 %v986
        %v1035 = vunpack.c.l.b16 %v987
        %v1036 = vunpack.c.l.b16 %v988
        %v1037 = vpack.c.b16 %v1034, %v1033
        %v1038 = vpack.c.b16 %v1036, %v1035
        %1041 = vmatprep.subr.bf16.mxu0 0
        %1042 = vmatpush1.bf16.msra.mxu0 %v1037
        %1043 = vmatprep.subr.bf16.mxu0 0
        %1044 = vmatpush1.bf16.msra.mxu0 %v1038
        %1045 = vmatprep.subr.bf16.mxu0 0
        %1046 = vmatpush1.bf16.msra.mxu0 0
        %1047 = vmatprep.subr.bf16.mxu0 0
        %1048 = vmatpush1.bf16.msra.mxu0 0
        %1049 = vmatprep.subr.bf16.mxu0 0
        %1050 = vmatpush1.bf16.msra.mxu0 0
        %1051 = vmatprep.subr.bf16.mxu0 0
        %1052 = vmatpush1.bf16.msra.mxu0 0
        %1053 = vmatprep.subr.bf16.mxu0 0
        %1054 = vmatpush1.bf16.msra.mxu0 0
        %1055 = vmatprep.subr.bf16.mxu0 0
        %1056 = vmatpush1.bf16.msra.mxu0 0
        %1057 = vmatprep.subr.bf16.mxu0 0
        %1058 = vmatpush1.bf16.msra.mxu0 0
        %1059 = vmatprep.subr.bf16.mxu0 0
        %1060 = vmatpush1.bf16.msra.mxu0 0
        %1061 = vmatprep.subr.bf16.mxu0 0
        %1062 = vmatpush1.bf16.msra.mxu0 0
        %1063 = vmatprep.subr.bf16.mxu0 0
        %1064 = vmatpush1.bf16.msra.mxu0 0
        %1065 = vmatprep.subr.bf16.mxu0 0
        %1066 = vmatpush1.bf16.msra.mxu0 0
        %1067 = vmatprep.subr.bf16.mxu0 0
        %1068 = vmatpush1.bf16.msra.mxu0 0
        %1069 = vmatprep.subr.bf16.mxu0 0
        %1070 = vmatpush1.bf16.msra.mxu0 0
        %1071 = vmatprep.subr.bf16.mxu0 0
        %1072 = vmatpush1.bf16.msra.mxu0 0
        %1073 = vmatprep.mubr.bf16.mxu0 0
        %1074 = vmatmul.mubr.bf16.gmra.mrb[0].mxu0 %v787
        %v1075 = vpop.f32.mrb[0].mxu0
        %v1076 = vadd.f32 %v1012, %v1075
        %v1077 = vpop.f32.mrb[0].mxu0
        %v1078 = vpop.f32.mrb[0].mxu0
        %v1079 = vpop.f32.mrb[0].mxu0
        %1080 = vdwg.mxu0
        %v1085 = vunpack.c.l.b16 %v989
        %v1086 = vunpack.c.l.b16 %v990
        %v1087 = vunpack.c.l.b16 %v991
        %v1088 = vunpack.c.l.b16 %v992
        %v1089 = vpack.c.b16 %v1086, %v1085
        %v1090 = vpack.c.b16 %v1088, %v1087
        %1093 = vmatprep.subr.bf16.mxu0 0
        %1094 = vmatpush1.bf16.msra.mxu0 %v1089
        %1095 = vmatprep.subr.bf16.mxu0 0
        %1096 = vmatpush1.bf16.msra.mxu0 %v1090
        %1097 = vmatprep.subr.bf16.mxu0 0
        %1098 = vmatpush1.bf16.msra.mxu0 0
        %1099 = vmatprep.subr.bf16.mxu0 0
        %1100 = vmatpush1.bf16.msra.mxu0 0
        %1101 = vmatprep.subr.bf16.mxu0 0
        %1102 = vmatpush1.bf16.msra.mxu0 0
        %1103 = vmatprep.subr.bf16.mxu0 0
        %1104 = vmatpush1.bf16.msra.mxu0 0
        %1105 = vmatprep.subr.bf16.mxu0 0
        %1106 = vmatpush1.bf16.msra.mxu0 0
        %1107 = vmatprep.subr.bf16.mxu0 0
        %1108 = vmatpush1.bf16.msra.mxu0 0
        %1109 = vmatprep.subr.bf16.mxu0 0
        %1110 = vmatpush1.bf16.msra.mxu0 0
        %1111 = vmatprep.subr.bf16.mxu0 0
        %1112 = vmatpush1.bf16.msra.mxu0 0
        %1113 = vmatprep.subr.bf16.mxu0 0
        %1114 = vmatpush1.bf16.msra.mxu0 0
        %1115 = vmatprep.subr.bf16.mxu0 0
        %1116 = vmatpush1.bf16.msra.mxu0 0
        %1117 = vmatprep.subr.bf16.mxu0 0
        %1118 = vmatpush1.bf16.msra.mxu0 0
        %1119 = vmatprep.subr.bf16.mxu0 0
        %1120 = vmatpush1.bf16.msra.mxu0 0
        %1121 = vmatprep.subr.bf16.mxu0 0
        %1122 = vmatpush1.bf16.msra.mxu0 0
        %1123 = vmatprep.subr.bf16.mxu0 0
        %1124 = vmatpush1.bf16.msra.mxu0 0
        %1125 = vmatprep.mubr.bf16.mxu0 0
        %1126 = vmatmul.mubr.bf16.gmra.mrb[0].mxu0 %v787
        %v1127 = vpop.f32.mrb[0].mxu0
        %v1128 = vadd.f32 %v1016, %v1127
        %v1129 = vpop.f32.mrb[0].mxu0
        %v1130 = vpop.f32.mrb[0].mxu0
        %v1131 = vpop.f32.mrb[0].mxu0
        %1132 = vdwg.mxu0
        %v1137 = vunpack.c.l.b16 %v993
        %v1138 = vunpack.c.l.b16 %v994
        %v1139 = vunpack.c.l.b16 %v995
        %v1140 = vunpack.c.l.b16 %v996
        %v1141 = vpack.c.b16 %v1138, %v1137
        %v1142 = vpack.c.b16 %v1140, %v1139
        %1145 = vmatprep.subr.bf16.mxu0 0
        %1146 = vmatpush1.bf16.msra.mxu0 %v1141
        %1147 = vmatprep.subr.bf16.mxu0 0
        %1148 = vmatpush1.bf16.msra.mxu0 %v1142
        %1149 = vmatprep.subr.bf16.mxu0 0
        %1150 = vmatpush1.bf16.msra.mxu0 0
        %1151 = vmatprep.subr.bf16.mxu0 0
        %1152 = vmatpush1.bf16.msra.mxu0 0
        %1153 = vmatprep.subr.bf16.mxu0 0
        %1154 = vmatpush1.bf16.msra.mxu0 0
        %1155 = vmatprep.subr.bf16.mxu0 0
        %1156 = vmatpush1.bf16.msra.mxu0 0
        %1157 = vmatprep.subr.bf16.mxu0 0
        %1158 = vmatpush1.bf16.msra.mxu0 0
        %1159 = vmatprep.subr.bf16.mxu0 0
        %1160 = vmatpush1.bf16.msra.mxu0 0
        %1161 = vmatprep.subr.bf16.mxu0 0
        %1162 = vmatpush1.bf16.msra.mxu0 0
        %1163 = vmatprep.subr.bf16.mxu0 0
        %1164 = vmatpush1.bf16.msra.mxu0 0
        %1165 = vmatprep.subr.bf16.mxu0 0
        %1166 = vmatpush1.bf16.msra.mxu0 0
        %1167 = vmatprep.subr.bf16.mxu0 0
        %1168 = vmatpush1.bf16.msra.mxu0 0
        %1169 = vmatprep.subr.bf16.mxu0 0
        %1170 = vmatpush1.bf16.msra.mxu0 0
        %1171 = vmatprep.subr.bf16.mxu0 0
        %1172 = vmatpush1.bf16.msra.mxu0 0
        %1173 = vmatprep.subr.bf16.mxu0 0
        %1174 = vmatpush1.bf16.msra.mxu0 0
        %1175 = vmatprep.subr.bf16.mxu0 0
        %1176 = vmatpush1.bf16.msra.mxu0 0
        %1177 = vmatprep.mubr.bf16.mxu0 0
        %1178 = vmatmul.mubr.bf16.gmra.mrb[0].mxu0 %v787
        %v1179 = vpop.f32.mrb[0].mxu0
        %v1180 = vadd.f32 %v1020, %v1179
        %v1181 = vpop.f32.mrb[0].mxu0
        %v1182 = vpop.f32.mrb[0].mxu0
        %v1183 = vpop.f32.mrb[0].mxu0
        %1184 = vdwg.mxu0
        %v1189 = vunpack.c.l.b16 %v997
        %v1190 = vunpack.c.l.b16 %v998
        %v1191 = vunpack.c.l.b16 %v999
        %v1192 = vunpack.c.l.b16 %v1000
        %v1193 = vpack.c.b16 %v1190, %v1189
        %v1194 = vpack.c.b16 %v1192, %v1191
        %1197 = vmatprep.subr.bf16.mxu0 0
        %1198 = vmatpush1.bf16.msra.mxu0 %v1193
        %1199 = vmatprep.subr.bf16.mxu0 0
        %1200 = vmatpush1.bf16.msra.mxu0 %v1194
        %1201 = vmatprep.subr.bf16.mxu0 0
        %1202 = vmatpush1.bf16.msra.mxu0 0
        %1203 = vmatprep.subr.bf16.mxu0 0
        %1204 = vmatpush1.bf16.msra.mxu0 0
        %1205 = vmatprep.subr.bf16.mxu0 0
        %1206 = vmatpush1.bf16.msra.mxu0 0
        %1207 = vmatprep.subr.bf16.mxu0 0
        %1208 = vmatpush1.bf16.msra.mxu0 0
        %1209 = vmatprep.subr.bf16.mxu0 0
        %1210 = vmatpush1.bf16.msra.mxu0 0
        %1211 = vmatprep.subr.bf16.mxu0 0
        %1212 = vmatpush1.bf16.msra.mxu0 0
        %1213 = vmatprep.subr.bf16.mxu0 0
        %1214 = vmatpush1.bf16.msra.mxu0 0
        %1215 = vmatprep.subr.bf16.mxu0 0
        %1216 = vmatpush1.bf16.msra.mxu0 0
        %1217 = vmatprep.subr.bf16.mxu0 0
        %1218 = vmatpush1.bf16.msra.mxu0 0
        %1219 = vmatprep.subr.bf16.mxu0 0
        %1220 = vmatpush1.bf16.msra.mxu0 0
        %1221 = vmatprep.subr.bf16.mxu0 0
        %1222 = vmatpush1.bf16.msra.mxu0 0
        %1223 = vmatprep.subr.bf16.mxu0 0
        %1224 = vmatpush1.bf16.msra.mxu0 0
        %1225 = vmatprep.subr.bf16.mxu0 0
        %1226 = vmatpush1.bf16.msra.mxu0 0
        %1227 = vmatprep.subr.bf16.mxu0 0
        %1228 = vmatpush1.bf16.msra.mxu0 0
        %1229 = vmatprep.mubr.bf16.mxu0 0
        %1230 = vmatmul.mubr.bf16.gmra.mrb[0].mxu0 %v787
        %v1231 = vpop.f32.mrb[0].mxu0
        %v1232 = vadd.f32 %v1024, %v1231
        %v1233 = vpop.f32.mrb[0].mxu0
        %v1234 = vpop.f32.mrb[0].mxu0
        %v1235 = vpop.f32.mrb[0].mxu0
        %1236 = vdwg.mxu0
        %v1237 = vld [vmem:[%s9] sm:$0xf]
        %v1238 = vld [vmem:[%s9 + $0x4] sm:$0xf]
        %v1239 = vld [vmem:[%s9 + $0x8] sm:$0xf]
        %v1240 = vld [vmem:[%s9 + $0xc] sm:$0xf]
        %v1241 = vld [vmem:[%s9 + $0x10] sm:$0xf]
        %v1242 = vld [vmem:[%s9 + $0x14] sm:$0xf]
        %v1243 = vld [vmem:[%s9 + $0x18] sm:$0xf]
        %v1244 = vld [vmem:[%s9 + $0x1c] sm:$0xf]
        %v1245 = vld [vmem:[%s9 + $0x20] sm:$0xf]
        %v1246 = vld [vmem:[%s9 + $0x24] sm:$0xf]
        %v1247 = vld [vmem:[%s9 + $0x28] sm:$0xf]
        %v1248 = vld [vmem:[%s9 + $0x2c] sm:$0xf]
        %v1249 = vld [vmem:[%s9 + $0x30] sm:$0xf]
        %v1250 = vld [vmem:[%s9 + $0x34] sm:$0xf]
        %v1251 = vld [vmem:[%s9 + $0x38] sm:$0xf]
        %v1252 = vld [vmem:[%s9 + $0x3c] sm:$0xf]
        %v1253 = vld [vmem:[%s10] sm:$0x1]
        %v1254 = vld [vmem:[%s10 + $0x1] sm:$0x1]
        %v1255 = vld [vmem:[%s10 + $0x2] sm:$0x1]
        %v1256 = vld [vmem:[%s10 + $0x3] sm:$0x1]
        %v1261 = vlaneseq
        %v1262 = vshrl.u32 %v1261, 7
        %v1263 = vsub.s32 0, %v1262
        %v1264 = vrot.slane %v1253, %v1263
        %v1265 = vlaneseq
        %v1266 = vshrl.u32 %v1265, 7
        %v1267 = vsub.s32 0, %v1266
        %v1268 = vrot.slane %v1254, %v1267
        %v1269 = vlaneseq
        %v1270 = vshrl.u32 %v1269, 7
        %v1271 = vsub.s32 0, %v1270
        %v1272 = vrot.slane %v1255, %v1271
        %v1273 = vlaneseq
        %v1274 = vshrl.u32 %v1273, 7
        %v1275 = vsub.s32 0, %v1274
        %v1276 = vrot.slane %v1256, %v1275
        %v1285 = vunpack.c.l.b16 %v1237
        %v1286 = vunpack.c.l.b16 %v1238
        %v1287 = vunpack.c.l.b16 %v1239
        %v1288 = vunpack.c.l.b16 %v1240
        %v1289 = vpack.c.b16 %v1286, %v1285
        %v1290 = vpack.c.b16 %v1288, %v1287
        %1293 = vmatprep.subr.bf16.mxu0 0
        %1294 = vmatpush1.bf16.msra.mxu0 %v1289
        %1295 = vmatprep.subr.bf16.mxu0 0
        %1296 = vmatpush1.bf16.msra.mxu0 %v1290
        %1297 = vmatprep.subr.bf16.mxu0 0
        %1298 = vmatpush1.bf16.msra.mxu0 0
        %1299 = vmatprep.subr.bf16.mxu0 0
        %1300 = vmatpush1.bf16.msra.mxu0 0
        %1301 = vmatprep.subr.bf16.mxu0 0
        %1302 = vmatpush1.bf16.msra.mxu0 0
        %1303 = vmatprep.subr.bf16.mxu0 0
        %1304 = vmatpush1.bf16.msra.mxu0 0
        %1305 = vmatprep.subr.bf16.mxu0 0
        %1306 = vmatpush1.bf16.msra.mxu0 0
        %1307 = vmatprep.subr.bf16.mxu0 0
        %1308 = vmatpush1.bf16.msra.mxu0 0
        %1309 = vmatprep.subr.bf16.mxu0 0
        %1310 = vmatpush1.bf16.msra.mxu0 0
        %1311 = vmatprep.subr.bf16.mxu0 0
        %1312 = vmatpush1.bf16.msra.mxu0 0
        %1313 = vmatprep.subr.bf16.mxu0 0
        %1314 = vmatpush1.bf16.msra.mxu0 0
        %1315 = vmatprep.subr.bf16.mxu0 0
        %1316 = vmatpush1.bf16.msra.mxu0 0
        %1317 = vmatprep.subr.bf16.mxu0 0
        %1318 = vmatpush1.bf16.msra.mxu0 0
        %1319 = vmatprep.subr.bf16.mxu0 0
        %1320 = vmatpush1.bf16.msra.mxu0 0
        %1321 = vmatprep.subr.bf16.mxu0 0
        %1322 = vmatpush1.bf16.msra.mxu0 0
        %1323 = vmatprep.subr.bf16.mxu0 0
        %1324 = vmatpush1.bf16.msra.mxu0 0
        %1325 = vmatprep.mubr.bf16.mxu0 0
        %1326 = vmatmul.mubr.bf16.gmra.mrb[0].mxu0 %v787
        %v1327 = vpop.f32.mrb[0].mxu0
        %v1328 = vadd.f32 %v1264, %v1327
        %v1329 = vpop.f32.mrb[0].mxu0
        %v1330 = vpop.f32.mrb[0].mxu0
        %v1331 = vpop.f32.mrb[0].mxu0
        %1332 = vdwg.mxu0
        %v1337 = vunpack.c.l.b16 %v1241
        %v1338 = vunpack.c.l.b16 %v1242
        %v1339 = vunpack.c.l.b16 %v1243
        %v1340 = vunpack.c.l.b16 %v1244
        %v1341 = vpack.c.b16 %v1338, %v1337
        %v1342 = vpack.c.b16 %v1340, %v1339
        %1345 = vmatprep.subr.bf16.mxu0 0
        %1346 = vmatpush1.bf16.msra.mxu0 %v1341
        %1347 = vmatprep.subr.bf16.mxu0 0
        %1348 = vmatpush1.bf16.msra.mxu0 %v1342
        %1349 = vmatprep.subr.bf16.mxu0 0
        %1350 = vmatpush1.bf16.msra.mxu0 0
        %1351 = vmatprep.subr.bf16.mxu0 0
        %1352 = vmatpush1.bf16.msra.mxu0 0
        %1353 = vmatprep.subr.bf16.mxu0 0
        %1354 = vmatpush1.bf16.msra.mxu0 0
        %1355 = vmatprep.subr.bf16.mxu0 0
        %1356 = vmatpush1.bf16.msra.mxu0 0
        %1357 = vmatprep.subr.bf16.mxu0 0
        %1358 = vmatpush1.bf16.msra.mxu0 0
        %1359 = vmatprep.subr.bf16.mxu0 0
        %1360 = vmatpush1.bf16.msra.mxu0 0
        %1361 = vmatprep.subr.bf16.mxu0 0
        %1362 = vmatpush1.bf16.msra.mxu0 0
        %1363 = vmatprep.subr.bf16.mxu0 0
        %1364 = vmatpush1.bf16.msra.mxu0 0
        %1365 = vmatprep.subr.bf16.mxu0 0
        %1366 = vmatpush1.bf16.msra.mxu0 0
        %1367 = vmatprep.subr.bf16.mxu0 0
        %1368 = vmatpush1.bf16.msra.mxu0 0
        %1369 = vmatprep.subr.bf16.mxu0 0
        %1370 = vmatpush1.bf16.msra.mxu0 0
        %1371 = vmatprep.subr.bf16.mxu0 0
        %1372 = vmatpush1.bf16.msra.mxu0 0
        %1373 = vmatprep.subr.bf16.mxu0 0
        %1374 = vmatpush1.bf16.msra.mxu0 0
        %1375 = vmatprep.subr.bf16.mxu0 0
        %1376 = vmatpush1.bf16.msra.mxu0 0
        %1377 = vmatprep.mubr.bf16.mxu0 0
        %1378 = vmatmul.mubr.bf16.gmra.mrb[0].mxu0 %v787
        %v1379 = vpop.f32.mrb[0].mxu0
        %v1380 = vadd.f32 %v1268, %v1379
        %v1381 = vpop.f32.mrb[0].mxu0
        %v1382 = vpop.f32.mrb[0].mxu0
        %v1383 = vpop.f32.mrb[0].mxu0
        %1384 = vdwg.mxu0
        %v1389 = vunpack.c.l.b16 %v1245
        %v1390 = vunpack.c.l.b16 %v1246
        %v1391 = vunpack.c.l.b16 %v1247
        %v1392 = vunpack.c.l.b16 %v1248
        %v1393 = vpack.c.b16 %v1390, %v1389
        %v1394 = vpack.c.b16 %v1392, %v1391
        %1397 = vmatprep.subr.bf16.mxu0 0
        %1398 = vmatpush1.bf16.msra.mxu0 %v1393
        %1399 = vmatprep.subr.bf16.mxu0 0
        %1400 = vmatpush1.bf16.msra.mxu0 %v1394
        %1401 = vmatprep.subr.bf16.mxu0 0
        %1402 = vmatpush1.bf16.msra.mxu0 0
        %1403 = vmatprep.subr.bf16.mxu0 0
        %1404 = vmatpush1.bf16.msra.mxu0 0
        %1405 = vmatprep.subr.bf16.mxu0 0
        %1406 = vmatpush1.bf16.msra.mxu0 0
        %1407 = vmatprep.subr.bf16.mxu0 0
        %1408 = vmatpush1.bf16.msra.mxu0 0
        %1409 = vmatprep.subr.bf16.mxu0 0
        %1410 = vmatpush1.bf16.msra.mxu0 0
        %1411 = vmatprep.subr.bf16.mxu0 0
        %1412 = vmatpush1.bf16.msra.mxu0 0
        %1413 = vmatprep.subr.bf16.mxu0 0
        %1414 = vmatpush1.bf16.msra.mxu0 0
        %1415 = vmatprep.subr.bf16.mxu0 0
        %1416 = vmatpush1.bf16.msra.mxu0 0
        %1417 = vmatprep.subr.bf16.mxu0 0
        %1418 = vmatpush1.bf16.msra.mxu0 0
        %1419 = vmatprep.subr.bf16.mxu0 0
        %1420 = vmatpush1.bf16.msra.mxu0 0
        %1421 = vmatprep.subr.bf16.mxu0 0
        %1422 = vmatpush1.bf16.msra.mxu0 0
        %1423 = vmatprep.subr.bf16.mxu0 0
        %1424 = vmatpush1.bf16.msra.mxu0 0
        %1425 = vmatprep.subr.bf16.mxu0 0
        %1426 = vmatpush1.bf16.msra.mxu0 0
        %1427 = vmatprep.subr.bf16.mxu0 0
        %1428 = vmatpush1.bf16.msra.mxu0 0
        %1429 = vmatprep.mubr.bf16.mxu0 0
        %1430 = vmatmul.mubr.bf16.gmra.mrb[0].mxu0 %v787
        %v1431 = vpop.f32.mrb[0].mxu0
        %v1432 = vadd.f32 %v1272, %v1431
        %v1433 = vpop.f32.mrb[0].mxu0
        %v1434 = vpop.f32.mrb[0].mxu0
        %v1435 = vpop.f32.mrb[0].mxu0
        %1436 = vdwg.mxu0
        %v1441 = vunpack.c.l.b16 %v1249
        %v1442 = vunpack.c.l.b16 %v1250
        %v1443 = vunpack.c.l.b16 %v1251
        %v1444 = vunpack.c.l.b16 %v1252
        %v1445 = vpack.c.b16 %v1442, %v1441
        %v1446 = vpack.c.b16 %v1444, %v1443
        %1449 = vmatprep.subr.bf16.mxu0 0
        %1450 = vmatpush1.bf16.msra.mxu0 %v1445
        %1451 = vmatprep.subr.bf16.mxu0 0
        %1452 = vmatpush1.bf16.msra.mxu0 %v1446
        %1453 = vmatprep.subr.bf16.mxu0 0
        %1454 = vmatpush1.bf16.msra.mxu0 0
        %1455 = vmatprep.subr.bf16.mxu0 0
        %1456 = vmatpush1.bf16.msra.mxu0 0
        %1457 = vmatprep.subr.bf16.mxu0 0
        %1458 = vmatpush1.bf16.msra.mxu0 0
        %1459 = vmatprep.subr.bf16.mxu0 0
        %1460 = vmatpush1.bf16.msra.mxu0 0
        %1461 = vmatprep.subr.bf16.mxu0 0
        %1462 = vmatpush1.bf16.msra.mxu0 0
        %1463 = vmatprep.subr.bf16.mxu0 0
        %1464 = vmatpush1.bf16.msra.mxu0 0
        %1465 = vmatprep.subr.bf16.mxu0 0
        %1466 = vmatpush1.bf16.msra.mxu0 0
        %1467 = vmatprep.subr.bf16.mxu0 0
        %1468 = vmatpush1.bf16.msra.mxu0 0
        %1469 = vmatprep.subr.bf16.mxu0 0
        %1470 = vmatpush1.bf16.msra.mxu0 0
        %1471 = vmatprep.subr.bf16.mxu0 0
        %1472 = vmatpush1.bf16.msra.mxu0 0
        %1473 = vmatprep.subr.bf16.mxu0 0
        %1474 = vmatpush1.bf16.msra.mxu0 0
        %1475 = vmatprep.subr.bf16.mxu0 0
        %1476 = vmatpush1.bf16.msra.mxu0 0
        %1477 = vmatprep.subr.bf16.mxu0 0
        %1478 = vmatpush1.bf16.msra.mxu0 0
        %1479 = vmatprep.subr.bf16.mxu0 0
        %1480 = vmatpush1.bf16.msra.mxu0 0
        %1481 = vmatprep.mubr.bf16.mxu0 0
        %1482 = vmatmul.mubr.bf16.gmra.mrb[0].mxu0 %v787
        %v1483 = vpop.f32.mrb[0].mxu0
        %v1484 = vadd.f32 %v1276, %v1483
        %v1485 = vpop.f32.mrb[0].mxu0
        %v1486 = vpop.f32.mrb[0].mxu0
        %v1487 = vpop.f32.mrb[0].mxu0
        %1488 = vdwg.mxu0
        %v1489 = vpack.c.bf16 %v824, %v824
        %v1490 = vpack.c.bf16 %v876, %v876
        %v1491 = vpack.c.bf16 %v928, %v928
        %v1492 = vpack.c.bf16 %v980, %v980
        %v1493 = vpack.c.bf16 %v1076, %v1076
        %v1494 = vpack.c.bf16 %v1128, %v1128
        %v1495 = vpack.c.bf16 %v1180, %v1180
        %v1496 = vpack.c.bf16 %v1232, %v1232
        %v1498 = vlaneseq
        %v1499 = vshrl.u32 %v1498, 7
        %v1500 = vsub.s32 0, %v1499
        %v1501 = vrot.slane %v697, %v1500
        %vm1503 = vcmask 64512
        %v1505 = vsel %vm1503, %v1489, 0
        %v1508 = vsel %vm1503, %v1493, 0
        %1510 = vmatprep.subr.bf16.mxu0 0
        %1511 = vmatpush1.bf16.xpose.msra.mxu0 %v1508
        %1512 = vmatprep.subr.bf16.mxu0 0
        %1513 = vmatpush1.bf16.xpose.msra.mxu0 0
        %1514 = vmatprep.subr.bf16.mxu0 0
        %1515 = vmatpush1.bf16.xpose.msra.mxu0 0
        %1516 = vmatprep.subr.bf16.mxu0 0
        %1517 = vmatpush1.bf16.xpose.msra.mxu0 0
        %1518 = vmatprep.subr.bf16.mxu0 0
        %1519 = vmatpush1.bf16.xpose.msra.mxu0 0
        %1520 = vmatprep.subr.bf16.mxu0 0
        %1521 = vmatpush1.bf16.xpose.msra.mxu0 0
        %1522 = vmatprep.subr.bf16.mxu0 0
        %1523 = vmatpush1.bf16.xpose.msra.mxu0 0
        %1524 = vmatprep.subr.bf16.mxu0 0
        %1525 = vmatpush1.bf16.xpose.msra.mxu0 0
        %1526 = vmatprep.subr.bf16.mxu0 0
        %1527 = vmatpush1.bf16.xpose.msra.mxu0 0
        %1528 = vmatprep.subr.bf16.mxu0 0
        %1529 = vmatpush1.bf16.xpose.msra.mxu0 0
        %1530 = vmatprep.subr.bf16.mxu0 0
        %1531 = vmatpush1.bf16.xpose.msra.mxu0 0
        %1532 = vmatprep.subr.bf16.mxu0 0
        %1533 = vmatpush1.bf16.xpose.msra.mxu0 0
        %1534 = vmatprep.subr.bf16.mxu0 0
        %1535 = vmatpush1.bf16.xpose.msra.mxu0 0
        %1536 = vmatprep.subr.bf16.mxu0 0
        %1537 = vmatpush1.bf16.xpose.msra.mxu0 0
        %1538 = vmatprep.subr.bf16.mxu0 0
        %1539 = vmatpush1.bf16.xpose.msra.mxu0 0
        %1540 = vmatprep.subr.bf16.mxu0 0
        %1541 = vmatpush1.bf16.xpose.msra.mxu0 0
        %1542 = vmatprep.mubr.bf16.mxu0 0
        %1543 = vmatmul.mubr.bf16.gmra.mrb[0].mxu0 %v1505
        %v1544 = vpop.f32.mrb[0].mxu0
        %v1545 = vadd.f32 %v1501, %v1544
        %v1546 = vpop.f32.mrb[0].mxu0
        %v1547 = vpop.f32.mrb[0].mxu0
        %v1548 = vpop.f32.mrb[0].mxu0
        %1549 = vdwg.mxu0
        %v1551 = vsel %vm1503, %v1490, 0
        %v1554 = vsel %vm1503, %v1494, 0
        %1556 = vmatprep.subr.bf16.mxu0 0
        %1557 = vmatpush1.bf16.xpose.msra.mxu0 %v1554
        %1558 = vmatprep.subr.bf16.mxu0 0
        %1559 = vmatpush1.bf16.xpose.msra.mxu0 0
        %1560 = vmatprep.subr.bf16.mxu0 0
        %1561 = vmatpush1.bf16.xpose.msra.mxu0 0
        %1562 = vmatprep.subr.bf16.mxu0 0
        %1563 = vmatpush1.bf16.xpose.msra.mxu0 0
        %1564 = vmatprep.subr.bf16.mxu0 0
        %1565 = vmatpush1.bf16.xpose.msra.mxu0 0
        %1566 = vmatprep.subr.bf16.mxu0 0
        %1567 = vmatpush1.bf16.xpose.msra.mxu0 0
        %1568 = vmatprep.subr.bf16.mxu0 0
        %1569 = vmatpush1.bf16.xpose.msra.mxu0 0
        %1570 = vmatprep.subr.bf16.mxu0 0
        %1571 = vmatpush1.bf16.xpose.msra.mxu0 0
        %1572 = vmatprep.subr.bf16.mxu0 0
        %1573 = vmatpush1.bf16.xpose.msra.mxu0 0
        %1574 = vmatprep.subr.bf16.mxu0 0
        %1575 = vmatpush1.bf16.xpose.msra.mxu0 0
        %1576 = vmatprep.subr.bf16.mxu0 0
        %1577 = vmatpush1.bf16.xpose.msra.mxu0 0
        %1578 = vmatprep.subr.bf16.mxu0 0
        %1579 = vmatpush1.bf16.xpose.msra.mxu0 0
        %1580 = vmatprep.subr.bf16.mxu0 0
        %1581 = vmatpush1.bf16.xpose.msra.mxu0 0
        %1582 = vmatprep.subr.bf16.mxu0 0
        %1583 = vmatpush1.bf16.xpose.msra.mxu0 0
        %1584 = vmatprep.subr.bf16.mxu0 0
        %1585 = vmatpush1.bf16.xpose.msra.mxu0 0
        %1586 = vmatprep.subr.bf16.mxu0 0
        %1587 = vmatpush1.bf16.xpose.msra.mxu0 0
        %1588 = vmatprep.mubr.bf16.mxu0 0
        %1589 = vmatmul.mubr.bf16.gmra.mrb[0].mxu0 %v1551
        %v1590 = vpop.f32.mrb[0].mxu0
        %v1591 = vadd.f32 %v1501, %v1590
        %v1592 = vpop.f32.mrb[0].mxu0
        %v1593 = vpop.f32.mrb[0].mxu0
        %v1594 = vpop.f32.mrb[0].mxu0
        %1595 = vdwg.mxu0
        %v1597 = vsel %vm1503, %v1491, 0
        %v1600 = vsel %vm1503, %v1495, 0
        %1602 = vmatprep.subr.bf16.mxu0 0
        %1603 = vmatpush1.bf16.xpose.msra.mxu0 %v1600
        %1604 = vmatprep.subr.bf16.mxu0 0
        %1605 = vmatpush1.bf16.xpose.msra.mxu0 0
        %1606 = vmatprep.subr.bf16.mxu0 0
        %1607 = vmatpush1.bf16.xpose.msra.mxu0 0
        %1608 = vmatprep.subr.bf16.mxu0 0
        %1609 = vmatpush1.bf16.xpose.msra.mxu0 0
        %1610 = vmatprep.subr.bf16.mxu0 0
        %1611 = vmatpush1.bf16.xpose.msra.mxu0 0
        %1612 = vmatprep.subr.bf16.mxu0 0
        %1613 = vmatpush1.bf16.xpose.msra.mxu0 0
        %1614 = vmatprep.subr.bf16.mxu0 0
        %1615 = vmatpush1.bf16.xpose.msra.mxu0 0
        %1616 = vmatprep.subr.bf16.mxu0 0
        %1617 = vmatpush1.bf16.xpose.msra.mxu0 0
        %1618 = vmatprep.subr.bf16.mxu0 0
        %1619 = vmatpush1.bf16.xpose.msra.mxu0 0
        %1620 = vmatprep.subr.bf16.mxu0 0
        %1621 = vmatpush1.bf16.xpose.msra.mxu0 0
        %1622 = vmatprep.subr.bf16.mxu0 0
        %1623 = vmatpush1.bf16.xpose.msra.mxu0 0
        %1624 = vmatprep.subr.bf16.mxu0 0
        %1625 = vmatpush1.bf16.xpose.msra.mxu0 0
        %1626 = vmatprep.subr.bf16.mxu0 0
        %1627 = vmatpush1.bf16.xpose.msra.mxu0 0
        %1628 = vmatprep.subr.bf16.mxu0 0
        %1629 = vmatpush1.bf16.xpose.msra.mxu0 0
        %1630 = vmatprep.subr.bf16.mxu0 0
        %1631 = vmatpush1.bf16.xpose.msra.mxu0 0
        %1632 = vmatprep.subr.bf16.mxu0 0
        %1633 = vmatpush1.bf16.xpose.msra.mxu0 0
        %1634 = vmatprep.mubr.bf16.mxu0 0
        %1635 = vmatmul.mubr.bf16.gmra.mrb[0].mxu0 %v1597
        %v1636 = vpop.f32.mrb[0].mxu0
        %v1637 = vadd.f32 %v1501, %v1636
        %v1638 = vpop.f32.mrb[0].mxu0
        %v1639 = vpop.f32.mrb[0].mxu0
        %v1640 = vpop.f32.mrb[0].mxu0
        %1641 = vdwg.mxu0
        %v1643 = vsel %vm1503, %v1492, 0
        %v1646 = vsel %vm1503, %v1496, 0
        %1648 = vmatprep.subr.bf16.mxu0 0
        %1649 = vmatpush1.bf16.xpose.msra.mxu0 %v1646
        %1650 = vmatprep.subr.bf16.mxu0 0
        %1651 = vmatpush1.bf16.xpose.msra.mxu0 0
        %1652 = vmatprep.subr.bf16.mxu0 0
        %1653 = vmatpush1.bf16.xpose.msra.mxu0 0
        %1654 = vmatprep.subr.bf16.mxu0 0
        %1655 = vmatpush1.bf16.xpose.msra.mxu0 0
        %1656 = vmatprep.subr.bf16.mxu0 0
        %1657 = vmatpush1.bf16.xpose.msra.mxu0 0
        %1658 = vmatprep.subr.bf16.mxu0 0
        %1659 = vmatpush1.bf16.xpose.msra.mxu0 0
        %1660 = vmatprep.subr.bf16.mxu0 0
        %1661 = vmatpush1.bf16.xpose.msra.mxu0 0
        %1662 = vmatprep.subr.bf16.mxu0 0
        %1663 = vmatpush1.bf16.xpose.msra.mxu0 0
        %1664 = vmatprep.subr.bf16.mxu0 0
        %1665 = vmatpush1.bf16.xpose.msra.mxu0 0
        %1666 = vmatprep.subr.bf16.mxu0 0
        %1667 = vmatpush1.bf16.xpose.msra.mxu0 0
        %1668 = vmatprep.subr.bf16.mxu0 0
        %1669 = vmatpush1.bf16.xpose.msra.mxu0 0
        %1670 = vmatprep.subr.bf16.mxu0 0
        %1671 = vmatpush1.bf16.xpose.msra.mxu0 0
        %1672 = vmatprep.subr.bf16.mxu0 0
        %1673 = vmatpush1.bf16.xpose.msra.mxu0 0
        %1674 = vmatprep.subr.bf16.mxu0 0
        %1675 = vmatpush1.bf16.xpose.msra.mxu0 0
        %1676 = vmatprep.subr.bf16.mxu0 0
        %1677 = vmatpush1.bf16.xpose.msra.mxu0 0
        %1678 = vmatprep.subr.bf16.mxu0 0
        %1679 = vmatpush1.bf16.xpose.msra.mxu0 0
        %1680 = vmatprep.mubr.bf16.mxu0 0
        %1681 = vmatmul.mubr.bf16.gmra.mrb[0].mxu0 %v1643
        %v1682 = vpop.f32.mrb[0].mxu0
        %v1683 = vadd.f32 %v1501, %v1682
        %v1684 = vpop.f32.mrb[0].mxu0
        %v1685 = vpop.f32.mrb[0].mxu0
        %v1686 = vpop.f32.mrb[0].mxu0
        %1687 = vdwg.mxu0
        %v1688 = vsel %vm1503, %v1545, -inf
        %1689 = vmax.xlane.f32.xlu0 %v1688
        %v1690 = vpop.xlane.xlu0 %1689
        %v1691 = vsel %vm1503, %v1591, -inf
        %1692 = vmax.xlane.f32.xlu0 %v1691
        %v1693 = vpop.xlane.xlu0 %1692
        %v1694 = vsel %vm1503, %v1637, -inf
        %1695 = vmax.xlane.f32.xlu0 %v1694
        %v1696 = vpop.xlane.xlu0 %1695
        %v1697 = vsel %vm1503, %v1683, -inf
        %1698 = vmax.xlane.f32.xlu0 %v1697
        %v1699 = vpop.xlane.xlu0 %1698
        %v1700 = vsub.f32 %v1545, %v1690
        %v1701 = vsub.f32 %v1591, %v1693
        %v1702 = vsub.f32 %v1637, %v1696
        %v1703 = vsub.f32 %v1683, %v1699
        %v1704 = vmul.f32 %v1700, 1.442695
        %v1705 = vpow.pop %v1704
        %v1706 = vmul.f32 %v1701, 1.442695
        %v1707 = vpow.pop %v1706
        %v1708 = vmul.f32 %v1702, 1.442695
        %v1709 = vpow.pop %v1708
        %v1710 = vmul.f32 %v1703, 1.442695
        %v1711 = vpow.pop %v1710
        %v1712 = vsel %vm1503, %v1705, 0.0
        %1713 = vadd.xlane.f32.xlu0 %v1712
        %v1714 = vpop.xlane.xlu0 %1713
        %v1715 = vsel %vm1503, %v1707, 0.0
        %1716 = vadd.xlane.f32.xlu0 %v1715
        %v1717 = vpop.xlane.xlu0 %1716
        %v1718 = vsel %vm1503, %v1709, 0.0
        %1719 = vadd.xlane.f32.xlu0 %v1718
        %v1720 = vpop.xlane.xlu0 %1719
        %v1721 = vsel %vm1503, %v1711, 0.0
        %1722 = vadd.xlane.f32.xlu0 %v1721
        %v1723 = vpop.xlane.xlu0 %1722
        %v1724 = vrcp.pop %v1714
        %v1725 = vmul.f32 %v1705, %v1724
        %v1726 = vrcp.pop %v1717
        %v1727 = vmul.f32 %v1707, %v1726
        %v1728 = vrcp.pop %v1720
        %v1729 = vmul.f32 %v1709, %v1728
        %v1730 = vrcp.pop %v1723
        %v1731 = vmul.f32 %v1711, %v1730
        %v1732 = vpack.c.bf16 %v1725, %v1725
        %v1733 = vpack.c.bf16 %v1727, %v1727
        %v1734 = vpack.c.bf16 %v1729, %v1729
        %v1735 = vpack.c.bf16 %v1731, %v1731
        %v1736 = vpack.c.bf16 %v1328, %v1328
        %v1737 = vpack.c.bf16 %v1380, %v1380
        %v1738 = vpack.c.bf16 %v1432, %v1432
        %v1739 = vpack.c.bf16 %v1484, %v1484
        %v1741 = vsel %vm1503, %v1732, 0
        %vm1743 = vcmask 1043456
        %v1745 = vsel %vm1743, %v1736, 0
        %1747 = vmatprep.subr.bf16.mxu0 0
        %1748 = vmatpush1.bf16.msra.mxu0 %v1745
        %1749 = vmatprep.subr.bf16.mxu0 0
        %1750 = vmatpush1.bf16.msra.mxu0 0
        %1751 = vmatprep.subr.bf16.mxu0 0
        %1752 = vmatpush1.bf16.msra.mxu0 0
        %1753 = vmatprep.subr.bf16.mxu0 0
        %1754 = vmatpush1.bf16.msra.mxu0 0
        %1755 = vmatprep.subr.bf16.mxu0 0
        %1756 = vmatpush1.bf16.msra.mxu0 0
        %1757 = vmatprep.subr.bf16.mxu0 0
        %1758 = vmatpush1.bf16.msra.mxu0 0
        %1759 = vmatprep.subr.bf16.mxu0 0
        %1760 = vmatpush1.bf16.msra.mxu0 0
        %1761 = vmatprep.subr.bf16.mxu0 0
        %1762 = vmatpush1.bf16.msra.mxu0 0
        %1763 = vmatprep.subr.bf16.mxu0 0
        %1764 = vmatpush1.bf16.msra.mxu0 0
        %1765 = vmatprep.subr.bf16.mxu0 0
        %1766 = vmatpush1.bf16.msra.mxu0 0
        %1767 = vmatprep.subr.bf16.mxu0 0
        %1768 = vmatpush1.bf16.msra.mxu0 0
        %1769 = vmatprep.subr.bf16.mxu0 0
        %1770 = vmatpush1.bf16.msra.mxu0 0
        %1771 = vmatprep.subr.bf16.mxu0 0
        %1772 = vmatpush1.bf16.msra.mxu0 0
        %1773 = vmatprep.subr.bf16.mxu0 0
        %1774 = vmatpush1.bf16.msra.mxu0 0
        %1775 = vmatprep.subr.bf16.mxu0 0
        %1776 = vmatpush1.bf16.msra.mxu0 0
        %1777 = vmatprep.subr.bf16.mxu0 0
        %1778 = vmatpush1.bf16.msra.mxu0 0
        %1779 = vmatprep.mubr.bf16.mxu0 0
        %1780 = vmatmul.mubr.bf16.gmra.mrb[0].mxu0 %v1741
        %v1781 = vpop.f32.mrb[0].mxu0
        %v1782 = vadd.f32 0.0, %v1781
        %v1783 = vpop.f32.mrb[0].mxu0
        %v1784 = vpop.f32.mrb[0].mxu0
        %v1785 = vpop.f32.mrb[0].mxu0
        %1786 = vdwg.mxu0
        %v1788 = vsel %vm1503, %v1733, 0
        %v1791 = vsel %vm1743, %v1737, 0
        %1793 = vmatprep.subr.bf16.mxu0 0
        %1794 = vmatpush1.bf16.msra.mxu0 %v1791
        %1795 = vmatprep.subr.bf16.mxu0 0
        %1796 = vmatpush1.bf16.msra.mxu0 0
        %1797 = vmatprep.subr.bf16.mxu0 0
        %1798 = vmatpush1.bf16.msra.mxu0 0
        %1799 = vmatprep.subr.bf16.mxu0 0
        %1800 = vmatpush1.bf16.msra.mxu0 0
        %1801 = vmatprep.subr.bf16.mxu0 0
        %1802 = vmatpush1.bf16.msra.mxu0 0
        %1803 = vmatprep.subr.bf16.mxu0 0
        %1804 = vmatpush1.bf16.msra.mxu0 0
        %1805 = vmatprep.subr.bf16.mxu0 0
        %1806 = vmatpush1.bf16.msra.mxu0 0
        %1807 = vmatprep.subr.bf16.mxu0 0
        %1808 = vmatpush1.bf16.msra.mxu0 0
        %1809 = vmatprep.subr.bf16.mxu0 0
        %1810 = vmatpush1.bf16.msra.mxu0 0
        %1811 = vmatprep.subr.bf16.mxu0 0
        %1812 = vmatpush1.bf16.msra.mxu0 0
        %1813 = vmatprep.subr.bf16.mxu0 0
        %1814 = vmatpush1.bf16.msra.mxu0 0
        %1815 = vmatprep.subr.bf16.mxu0 0
        %1816 = vmatpush1.bf16.msra.mxu0 0
        %1817 = vmatprep.subr.bf16.mxu0 0
        %1818 = vmatpush1.bf16.msra.mxu0 0
        %1819 = vmatprep.subr.bf16.mxu0 0
        %1820 = vmatpush1.bf16.msra.mxu0 0
        %1821 = vmatprep.subr.bf16.mxu0 0
        %1822 = vmatpush1.bf16.msra.mxu0 0
        %1823 = vmatprep.subr.bf16.mxu0 0
        %1824 = vmatpush1.bf16.msra.mxu0 0
        %1825 = vmatprep.mubr.bf16.mxu0 0
        %1826 = vmatmul.mubr.bf16.gmra.mrb[0].mxu0 %v1788
        %v1827 = vpop.f32.mrb[0].mxu0
        %v1828 = vadd.f32 0.0, %v1827
        %v1829 = vpop.f32.mrb[0].mxu0
        %v1830 = vpop.f32.mrb[0].mxu0
        %v1831 = vpop.f32.mrb[0].mxu0
        %1832 = vdwg.mxu0
        %v1834 = vsel %vm1503, %v1734, 0
        %v1837 = vsel %vm1743, %v1738, 0
        %1839 = vmatprep.subr.bf16.mxu0 0
        %1840 = vmatpush1.bf16.msra.mxu0 %v1837
        %1841 = vmatprep.subr.bf16.mxu0 0
        %1842 = vmatpush1.bf16.msra.mxu0 0
        %1843 = vmatprep.subr.bf16.mxu0 0
        %1844 = vmatpush1.bf16.msra.mxu0 0
        %1845 = vmatprep.subr.bf16.mxu0 0
        %1846 = vmatpush1.bf16.msra.mxu0 0
        %1847 = vmatprep.subr.bf16.mxu0 0
        %1848 = vmatpush1.bf16.msra.mxu0 0
        %1849 = vmatprep.subr.bf16.mxu0 0
        %1850 = vmatpush1.bf16.msra.mxu0 0
        %1851 = vmatprep.subr.bf16.mxu0 0
        %1852 = vmatpush1.bf16.msra.mxu0 0
        %1853 = vmatprep.subr.bf16.mxu0 0
        %1854 = vmatpush1.bf16.msra.mxu0 0
        %1855 = vmatprep.subr.bf16.mxu0 0
        %1856 = vmatpush1.bf16.msra.mxu0 0
        %1857 = vmatprep.subr.bf16.mxu0 0
        %1858 = vmatpush1.bf16.msra.mxu0 0
        %1859 = vmatprep.subr.bf16.mxu0 0
        %1860 = vmatpush1.bf16.msra.mxu0 0
        %1861 = vmatprep.subr.bf16.mxu0 0
        %1862 = vmatpush1.bf16.msra.mxu0 0
        %1863 = vmatprep.subr.bf16.mxu0 0
        %1864 = vmatpush1.bf16.msra.mxu0 0
        %1865 = vmatprep.subr.bf16.mxu0 0
        %1866 = vmatpush1.bf16.msra.mxu0 0
        %1867 = vmatprep.subr.bf16.mxu0 0
        %1868 = vmatpush1.bf16.msra.mxu0 0
        %1869 = vmatprep.subr.bf16.mxu0 0
        %1870 = vmatpush1.bf16.msra.mxu0 0
        %1871 = vmatprep.mubr.bf16.mxu0 0
        %1872 = vmatmul.mubr.bf16.gmra.mrb[0].mxu0 %v1834
        %v1873 = vpop.f32.mrb[0].mxu0
        %v1874 = vadd.f32 0.0, %v1873
        %v1875 = vpop.f32.mrb[0].mxu0
        %v1876 = vpop.f32.mrb[0].mxu0
        %v1877 = vpop.f32.mrb[0].mxu0
        %1878 = vdwg.mxu0
        %v1880 = vsel %vm1503, %v1735, 0
        %v1883 = vsel %vm1743, %v1739, 0
        %1885 = vmatprep.subr.bf16.mxu0 0
        %1886 = vmatpush1.bf16.msra.mxu0 %v1883
        %1887 = vmatprep.subr.bf16.mxu0 0
        %1888 = vmatpush1.bf16.msra.mxu0 0
        %1889 = vmatprep.subr.bf16.mxu0 0
        %1890 = vmatpush1.bf16.msra.mxu0 0
        %1891 = vmatprep.subr.bf16.mxu0 0
        %1892 = vmatpush1.bf16.msra.mxu0 0
        %1893 = vmatprep.subr.bf16.mxu0 0
        %1894 = vmatpush1.bf16.msra.mxu0 0
        %1895 = vmatprep.subr.bf16.mxu0 0
        %1896 = vmatpush1.bf16.msra.mxu0 0
        %1897 = vmatprep.subr.bf16.mxu0 0
        %1898 = vmatpush1.bf16.msra.mxu0 0
        %1899 = vmatprep.subr.bf16.mxu0 0
        %1900 = vmatpush1.bf16.msra.mxu0 0
        %1901 = vmatprep.subr.bf16.mxu0 0
        %1902 = vmatpush1.bf16.msra.mxu0 0
        %1903 = vmatprep.subr.bf16.mxu0 0
        %1904 = vmatpush1.bf16.msra.mxu0 0
        %1905 = vmatprep.subr.bf16.mxu0 0
        %1906 = vmatpush1.bf16.msra.mxu0 0
        %1907 = vmatprep.subr.bf16.mxu0 0
        %1908 = vmatpush1.bf16.msra.mxu0 0
        %1909 = vmatprep.subr.bf16.mxu0 0
        %1910 = vmatpush1.bf16.msra.mxu0 0
        %1911 = vmatprep.subr.bf16.mxu0 0
        %1912 = vmatpush1.bf16.msra.mxu0 0
        %1913 = vmatprep.subr.bf16.mxu0 0
        %1914 = vmatpush1.bf16.msra.mxu0 0
        %1915 = vmatprep.subr.bf16.mxu0 0
        %1916 = vmatpush1.bf16.msra.mxu0 0
        %1917 = vmatprep.mubr.bf16.mxu0 0
        %1918 = vmatmul.mubr.bf16.gmra.mrb[0].mxu0 %v1880
        %v1919 = vpop.f32.mrb[0].mxu0
        %v1920 = vadd.f32 0.0, %v1919
        %v1921 = vpop.f32.mrb[0].mxu0
        %v1922 = vpop.f32.mrb[0].mxu0
        %v1923 = vpop.f32.mrb[0].mxu0
        %1924 = vdwg.mxu0
        %v1925 = vpack.c.bf16 %v1782, %v1782
        %v1926 = vpack.c.bf16 %v1828, %v1828
        %v1927 = vpack.c.bf16 %v1874, %v1874
        %v1928 = vpack.c.bf16 %v1920, %v1920
        %v1929 = vld [vmem:[%s11] sm:$0xf]
        %v1930 = vld [vmem:[%s11 + $0x4] sm:$0xf]
        %v1931 = vld [vmem:[%s11 + $0x8] sm:$0xf]
        %v1932 = vld [vmem:[%s11 + $0xc] sm:$0xf]
        %v1934 = vsel %vm1503, %v1925, 0
        %v1937 = vsel %vm1743, %v1929, 0
        %1939 = vmatprep.subr.bf16.mxu0 0
        %1940 = vmatpush1.bf16.msra.mxu0 %v1937
        %1941 = vmatprep.subr.bf16.mxu0 0
        %1942 = vmatpush1.bf16.msra.mxu0 0
        %1943 = vmatprep.subr.bf16.mxu0 0
        %1944 = vmatpush1.bf16.msra.mxu0 0
        %1945 = vmatprep.subr.bf16.mxu0 0
        %1946 = vmatpush1.bf16.msra.mxu0 0
        %1947 = vmatprep.subr.bf16.mxu0 0
        %1948 = vmatpush1.bf16.msra.mxu0 0
        %1949 = vmatprep.subr.bf16.mxu0 0
        %1950 = vmatpush1.bf16.msra.mxu0 0
        %1951 = vmatprep.subr.bf16.mxu0 0
        %1952 = vmatpush1.bf16.msra.mxu0 0
        %1953 = vmatprep.subr.bf16.mxu0 0
        %1954 = vmatpush1.bf16.msra.mxu0 0
        %1955 = vmatprep.subr.bf16.mxu0 0
        %1956 = vmatpush1.bf16.msra.mxu0 0
        %1957 = vmatprep.subr.bf16.mxu0 0
        %1958 = vmatpush1.bf16.msra.mxu0 0
        %1959 = vmatprep.subr.bf16.mxu0 0
        %1960 = vmatpush1.bf16.msra.mxu0 0
        %1961 = vmatprep.subr.bf16.mxu0 0
        %1962 = vmatpush1.bf16.msra.mxu0 0
        %1963 = vmatprep.subr.bf16.mxu0 0
        %1964 = vmatpush1.bf16.msra.mxu0 0
        %1965 = vmatprep.subr.bf16.mxu0 0
        %1966 = vmatpush1.bf16.msra.mxu0 0
        %1967 = vmatprep.subr.bf16.mxu0 0
        %1968 = vmatpush1.bf16.msra.mxu0 0
        %1969 = vmatprep.subr.bf16.mxu0 0
        %1970 = vmatpush1.bf16.msra.mxu0 0
        %1971 = vmatprep.mubr.bf16.mxu0 0
        %1972 = vmatmul.mubr.bf16.gmra.mrb[0].mxu0 %v1934
        %v1973 = vpop.f32.mrb[0].mxu0
        %v1974 = vadd.f32 0.0, %v1973
        %v1975 = vpop.f32.mrb[0].mxu0
        %v1976 = vpop.f32.mrb[0].mxu0
        %v1977 = vpop.f32.mrb[0].mxu0
        %1978 = vdwg.mxu0
        %v1980 = vsel %vm1503, %v1926, 0
        %v1983 = vsel %vm1743, %v1930, 0
        %1985 = vmatprep.subr.bf16.mxu0 0
        %1986 = vmatpush1.bf16.msra.mxu0 %v1983
        %1987 = vmatprep.subr.bf16.mxu0 0
        %1988 = vmatpush1.bf16.msra.mxu0 0
        %1989 = vmatprep.subr.bf16.mxu0 0
        %1990 = vmatpush1.bf16.msra.mxu0 0
        %1991 = vmatprep.subr.bf16.mxu0 0
        %1992 = vmatpush1.bf16.msra.mxu0 0
        %1993 = vmatprep.subr.bf16.mxu0 0
        %1994 = vmatpush1.bf16.msra.mxu0 0
        %1995 = vmatprep.subr.bf16.mxu0 0
        %1996 = vmatpush1.bf16.msra.mxu0 0
        %1997 = vmatprep.subr.bf16.mxu0 0
        %1998 = vmatpush1.bf16.msra.mxu0 0
        %1999 = vmatprep.subr.bf16.mxu0 0
        %2000 = vmatpush1.bf16.msra.mxu0 0
        %2001 = vmatprep.subr.bf16.mxu0 0
        %2002 = vmatpush1.bf16.msra.mxu0 0
        %2003 = vmatprep.subr.bf16.mxu0 0
        %2004 = vmatpush1.bf16.msra.mxu0 0
        %2005 = vmatprep.subr.bf16.mxu0 0
        %2006 = vmatpush1.bf16.msra.mxu0 0
        %2007 = vmatprep.subr.bf16.mxu0 0
        %2008 = vmatpush1.bf16.msra.mxu0 0
        %2009 = vmatprep.subr.bf16.mxu0 0
        %2010 = vmatpush1.bf16.msra.mxu0 0
        %2011 = vmatprep.subr.bf16.mxu0 0
        %2012 = vmatpush1.bf16.msra.mxu0 0
        %2013 = vmatprep.subr.bf16.mxu0 0
        %2014 = vmatpush1.bf16.msra.mxu0 0
        %2015 = vmatprep.subr.bf16.mxu0 0
        %2016 = vmatpush1.bf16.msra.mxu0 0
        %2017 = vmatprep.mubr.bf16.mxu0 0
        %2018 = vmatmul.mubr.bf16.gmra.mrb[0].mxu0 %v1980
        %v2019 = vpop.f32.mrb[0].mxu0
        %v2020 = vadd.f32 0.0, %v2019
        %v2021 = vpop.f32.mrb[0].mxu0
        %v2022 = vpop.f32.mrb[0].mxu0
        %v2023 = vpop.f32.mrb[0].mxu0
        %2024 = vdwg.mxu0
        %v2026 = vsel %vm1503, %v1927, 0
        %v2029 = vsel %vm1743, %v1931, 0
        %2031 = vmatprep.subr.bf16.mxu0 0
        %2032 = vmatpush1.bf16.msra.mxu0 %v2029
        %2033 = vmatprep.subr.bf16.mxu0 0
        %2034 = vmatpush1.bf16.msra.mxu0 0
        %2035 = vmatprep.subr.bf16.mxu0 0
        %2036 = vmatpush1.bf16.msra.mxu0 0
        %2037 = vmatprep.subr.bf16.mxu0 0
        %2038 = vmatpush1.bf16.msra.mxu0 0
        %2039 = vmatprep.subr.bf16.mxu0 0
        %2040 = vmatpush1.bf16.msra.mxu0 0
        %2041 = vmatprep.subr.bf16.mxu0 0
        %2042 = vmatpush1.bf16.msra.mxu0 0
        %2043 = vmatprep.subr.bf16.mxu0 0
        %2044 = vmatpush1.bf16.msra.mxu0 0
        %2045 = vmatprep.subr.bf16.mxu0 0
        %2046 = vmatpush1.bf16.msra.mxu0 0
        %2047 = vmatprep.subr.bf16.mxu0 0
        %2048 = vmatpush1.bf16.msra.mxu0 0
        %2049 = vmatprep.subr.bf16.mxu0 0
        %2050 = vmatpush1.bf16.msra.mxu0 0
        %2051 = vmatprep.subr.bf16.mxu0 0
        %2052 = vmatpush1.bf16.msra.mxu0 0
        %2053 = vmatprep.subr.bf16.mxu0 0
        %2054 = vmatpush1.bf16.msra.mxu0 0
        %2055 = vmatprep.subr.bf16.mxu0 0
        %2056 = vmatpush1.bf16.msra.mxu0 0
        %2057 = vmatprep.subr.bf16.mxu0 0
        %2058 = vmatpush1.bf16.msra.mxu0 0
        %2059 = vmatprep.subr.bf16.mxu0 0
        %2060 = vmatpush1.bf16.msra.mxu0 0
        %2061 = vmatprep.subr.bf16.mxu0 0
        %2062 = vmatpush1.bf16.msra.mxu0 0
        %2063 = vmatprep.mubr.bf16.mxu0 0
        %2064 = vmatmul.mubr.bf16.gmra.mrb[0].mxu0 %v2026
        %v2065 = vpop.f32.mrb[0].mxu0
        %v2066 = vadd.f32 0.0, %v2065
        %v2067 = vpop.f32.mrb[0].mxu0
        %v2068 = vpop.f32.mrb[0].mxu0
        %v2069 = vpop.f32.mrb[0].mxu0
        %2070 = vdwg.mxu0
        %v2072 = vsel %vm1503, %v1928, 0
        %v2075 = vsel %vm1743, %v1932, 0
        %2077 = vmatprep.subr.bf16.mxu0 0
        %2078 = vmatpush1.bf16.msra.mxu0 %v2075
        %2079 = vmatprep.subr.bf16.mxu0 0
        %2080 = vmatpush1.bf16.msra.mxu0 0
        %2081 = vmatprep.subr.bf16.mxu0 0
        %2082 = vmatpush1.bf16.msra.mxu0 0
        %2083 = vmatprep.subr.bf16.mxu0 0
        %2084 = vmatpush1.bf16.msra.mxu0 0
        %2085 = vmatprep.subr.bf16.mxu0 0
        %2086 = vmatpush1.bf16.msra.mxu0 0
        %2087 = vmatprep.subr.bf16.mxu0 0
        %2088 = vmatpush1.bf16.msra.mxu0 0
        %2089 = vmatprep.subr.bf16.mxu0 0
        %2090 = vmatpush1.bf16.msra.mxu0 0
        %2091 = vmatprep.subr.bf16.mxu0 0
        %2092 = vmatpush1.bf16.msra.mxu0 0
        %2093 = vmatprep.subr.bf16.mxu0 0
        %2094 = vmatpush1.bf16.msra.mxu0 0
        %2095 = vmatprep.subr.bf16.mxu0 0
        %2096 = vmatpush1.bf16.msra.mxu0 0
        %2097 = vmatprep.subr.bf16.mxu0 0
        %2098 = vmatpush1.bf16.msra.mxu0 0
        %2099 = vmatprep.subr.bf16.mxu0 0
        %2100 = vmatpush1.bf16.msra.mxu0 0
        %2101 = vmatprep.subr.bf16.mxu0 0
        %2102 = vmatpush1.bf16.msra.mxu0 0
        %2103 = vmatprep.subr.bf16.mxu0 0
        %2104 = vmatpush1.bf16.msra.mxu0 0
        %2105 = vmatprep.subr.bf16.mxu0 0
        %2106 = vmatpush1.bf16.msra.mxu0 0
        %2107 = vmatprep.subr.bf16.mxu0 0
        %2108 = vmatpush1.bf16.msra.mxu0 0
        %2109 = vmatprep.mubr.bf16.mxu0 0
        %2110 = vmatmul.mubr.bf16.gmra.mrb[0].mxu0 %v2072
        %v2111 = vpop.f32.mrb[0].mxu0
        %v2112 = vadd.f32 0.0, %v2111
        %v2113 = vpop.f32.mrb[0].mxu0
        %v2114 = vpop.f32.mrb[0].mxu0
        %v2115 = vpop.f32.mrb[0].mxu0
        %2116 = vdwg.mxu0
        %v2117 = vsel %vm700, %v1974, 0.0
        %v2118 = vsel %vm700, %v2020, 0.0
        %v2119 = vadd.f32 %v2117, %v2118
        %v2120 = vsel %vm700, %v2066, 0.0
        %v2121 = vadd.f32 %v2119, %v2120
        %v2122 = vsel %vm700, %v2112, 0.0
        %v2123 = vadd.f32 %v2121, %v2122
        %v2124 = vld [vmem:[%s12] sm:$0x1]
        %v2126 = vlaneseq
        %v2127 = vshrl.u32 %v2126, 7
        %v2128 = vsub.s32 0, %v2127
        %v2129 = vrot.slane %v2124, %v2128
        %v2131 = vadd.f32 %v2123, %v2129
        %v2132 = vadd.f32 %v728, %v2131
        %v2133 = vld [vmem:[%s13] sm:$0x1]
        %v2134 = vld [vmem:[%s14] sm:$0x1]
        %v2135 = vsel %vm700, %v2132, 0.0
        %2136 = vadd.xlane.f32.xlu0 %v2135
        %v2137 = vpop.xlane.xlu0 %2136
        %v2138 = vmul.f32 %v2137, %v704
        %v2139 = vsub.f32 %v2132, %v2138
        %v2140 = vmul.f32 %v2139, %v2139
        %v2141 = vsel %vm700, %v2140, 0.0
        %2142 = vadd.xlane.f32.xlu0 %v2141
        %v2143 = vpop.xlane.xlu0 %2142
        %v2144 = vmul.f32 %v2143, %v704
        %v2145 = vadd.f32 %v2144, 1e-12
        %v2146 = vrsqrt.pop %v2145
        %v2147 = vmul.f32 %v2139, %v2146
        %v2149 = vlaneseq
        %v2150 = vshrl.u32 %v2149, 7
        %v2151 = vsub.s32 0, %v2150
        %v2152 = vrot.slane %v2133, %v2151
        %v2154 = vmul.f32 %v2147, %v2152
        %v2156 = vlaneseq
        %v2157 = vshrl.u32 %v2156, 7
        %v2158 = vsub.s32 0, %v2157
        %v2159 = vrot.slane %v2134, %v2158
        %v2161 = vadd.f32 %v2154, %v2159
        %v2162 = vpack.c.bf16 %v2161, %v2161
        %v2163 = vld [vmem:[%s15] sm:$0xf]
        %v2164 = vld [vmem:[%s15 + $0x4] sm:$0xf]
        %v2165 = vld [vmem:[%s15 + $0x8] sm:$0xf]
        %v2166 = vld [vmem:[%s15 + $0xc] sm:$0xf]
        %v2167 = vld [vmem:[%s16] sm:$0x1]
        %v2169 = vlaneseq
        %v2170 = vshrl.u32 %v2169, 7
        %v2171 = vsub.s32 0, %v2170
        %v2172 = vrot.slane %v2167, %v2171
        %v2178 = vunpack.c.l.b16 %v2163
        %v2179 = vunpack.c.l.b16 %v2164
        %v2180 = vunpack.c.l.b16 %v2165
        %v2181 = vunpack.c.l.b16 %v2166
        %v2182 = vpack.c.b16 %v2179, %v2178
        %v2183 = vpack.c.b16 %v2181, %v2180
        %v2187 = vsel %vm700, %v2162, 0
        %2189 = vmatprep.subr.bf16.mxu0 0
        %2190 = vmatpush1.bf16.msra.mxu0 %v2182
        %2191 = vmatprep.subr.bf16.mxu0 0
        %2192 = vmatpush1.bf16.msra.mxu0 %v2183
        %2193 = vmatprep.subr.bf16.mxu0 0
        %2194 = vmatpush1.bf16.msra.mxu0 0
        %2195 = vmatprep.subr.bf16.mxu0 0
        %2196 = vmatpush1.bf16.msra.mxu0 0
        %2197 = vmatprep.subr.bf16.mxu0 0
        %2198 = vmatpush1.bf16.msra.mxu0 0
        %2199 = vmatprep.subr.bf16.mxu0 0
        %2200 = vmatpush1.bf16.msra.mxu0 0
        %2201 = vmatprep.subr.bf16.mxu0 0
        %2202 = vmatpush1.bf16.msra.mxu0 0
        %2203 = vmatprep.subr.bf16.mxu0 0
        %2204 = vmatpush1.bf16.msra.mxu0 0
        %2205 = vmatprep.subr.bf16.mxu0 0
        %2206 = vmatpush1.bf16.msra.mxu0 0
        %2207 = vmatprep.subr.bf16.mxu0 0
        %2208 = vmatpush1.bf16.msra.mxu0 0
        %2209 = vmatprep.subr.bf16.mxu0 0
        %2210 = vmatpush1.bf16.msra.mxu0 0
        %2211 = vmatprep.subr.bf16.mxu0 0
        %2212 = vmatpush1.bf16.msra.mxu0 0
        %2213 = vmatprep.subr.bf16.mxu0 0
        %2214 = vmatpush1.bf16.msra.mxu0 0
        %2215 = vmatprep.subr.bf16.mxu0 0
        %2216 = vmatpush1.bf16.msra.mxu0 0
        %2217 = vmatprep.subr.bf16.mxu0 0
        %2218 = vmatpush1.bf16.msra.mxu0 0
        %2219 = vmatprep.subr.bf16.mxu0 0
        %2220 = vmatpush1.bf16.msra.mxu0 0
        %2221 = vmatprep.mubr.bf16.mxu0 0
        %2222 = vmatmul.mubr.bf16.gmra.mrb[0].mxu0 %v2187
        %v2223 = vpop.f32.mrb[0].mxu0
        %v2224 = vadd.f32 %v2172, %v2223
        %v2225 = vpop.f32.mrb[0].mxu0
        %v2226 = vpop.f32.mrb[0].mxu0
        %v2227 = vpop.f32.mrb[0].mxu0
        %2228 = vdwg.mxu0
        %v2229 = vmul.f32 %v2224, %v2224
        %v2230 = vmul.f32 %v2224, %v2229
        %v2231 = vmul.f32 %v2230, 0.044715
        %v2232 = vadd.f32 %v2224, %v2231
        %v2233 = vmul.f32 %v2232, 0.7978846
        %v2234 = vtanh.pop %v2233
        %v2235 = vadd.f32 %v2234, 1.0
        %v2236 = vmul.f32 %v2235, 0.5
        %v2237 = vmul.f32 %v2224, %v2236
        %v2238 = vpack.c.bf16 %v2237, %v2237
        %v2239 = vld [vmem:[%s17] sm:$0xf]
        %v2240 = vld [vmem:[%s17 + $0x4] sm:$0xf]
        %v2241 = vld [vmem:[%s17 + $0x8] sm:$0xf]
        %v2242 = vld [vmem:[%s17 + $0xc] sm:$0xf]
        %v2243 = vld [vmem:[%s17 + $0x10] sm:$0xf]
        %v2244 = vld [vmem:[%s17 + $0x14] sm:$0xf]
        %v2245 = vld [vmem:[%s17 + $0x18] sm:$0xf]
        %v2246 = vld [vmem:[%s17 + $0x1c] sm:$0xf]
        %v2247 = vld [vmem:[%s18] sm:$0x1]
        %v2249 = vlaneseq
        %v2250 = vshrl.u32 %v2249, 7
        %v2251 = vsub.s32 0, %v2250
        %v2252 = vrot.slane %v2247, %v2251
        %v2262 = vunpack.c.l.b16 %v2239
        %v2263 = vunpack.c.l.b16 %v2240
        %v2264 = vunpack.c.l.b16 %v2241
        %v2265 = vunpack.c.l.b16 %v2242
        %v2266 = vunpack.c.l.b16 %v2243
        %v2267 = vunpack.c.l.b16 %v2244
        %v2268 = vunpack.c.l.b16 %v2245
        %v2269 = vunpack.c.l.b16 %v2246
        %v2270 = vpack.c.b16 %v2263, %v2262
        %v2271 = vpack.c.b16 %v2265, %v2264
        %v2272 = vpack.c.b16 %v2267, %v2266
        %v2273 = vpack.c.b16 %v2269, %v2268
        %vm2278 = vcmask 523264
        %v2280 = vsel %vm2278, %v2238, 0
        %2282 = vmatprep.subr.bf16.mxu0 0
        %2283 = vmatpush1.bf16.msra.mxu0 %v2270
        %2284 = vmatprep.subr.bf16.mxu0 0
        %2285 = vmatpush1.bf16.msra.mxu0 %v2271
        %2286 = vmatprep.subr.bf16.mxu0 0
        %2287 = vmatpush1.bf16.msra.mxu0 %v2272
        %2288 = vmatprep.subr.bf16.mxu0 0
        %2289 = vmatpush1.bf16.msra.mxu0 %v2273
        %2290 = vmatprep.subr.bf16.mxu0 0
        %2291 = vmatpush1.bf16.msra.mxu0 0
        %2292 = vmatprep.subr.bf16.mxu0 0
        %2293 = vmatpush1.bf16.msra.mxu0 0
        %2294 = vmatprep.subr.bf16.mxu0 0
        %2295 = vmatpush1.bf16.msra.mxu0 0
        %2296 = vmatprep.subr.bf16.mxu0 0
        %2297 = vmatpush1.bf16.msra.mxu0 0
        %2298 = vmatprep.subr.bf16.mxu0 0
        %2299 = vmatpush1.bf16.msra.mxu0 0
        %2300 = vmatprep.subr.bf16.mxu0 0
        %2301 = vmatpush1.bf16.msra.mxu0 0
        %2302 = vmatprep.subr.bf16.mxu0 0
        %2303 = vmatpush1.bf16.msra.mxu0 0
        %2304 = vmatprep.subr.bf16.mxu0 0
        %2305 = vmatpush1.bf16.msra.mxu0 0
        %2306 = vmatprep.subr.bf16.mxu0 0
        %2307 = vmatpush1.bf16.msra.mxu0 0
        %2308 = vmatprep.subr.bf16.mxu0 0
        %2309 = vmatpush1.bf16.msra.mxu0 0
        %2310 = vmatprep.subr.bf16.mxu0 0
        %2311 = vmatpush1.bf16.msra.mxu0 0
        %2312 = vmatprep.subr.bf16.mxu0 0
        %2313 = vmatpush1.bf16.msra.mxu0 0
        %2314 = vmatprep.mubr.bf16.mxu0 0
        %2315 = vmatmul.mubr.bf16.gmra.mrb[0].mxu0 %v2280
        %v2316 = vpop.f32.mrb[0].mxu0
        %v2317 = vadd.f32 %v2252, %v2316
        %v2318 = vpop.f32.mrb[0].mxu0
        %v2319 = vpop.f32.mrb[0].mxu0
        %v2320 = vpop.f32.mrb[0].mxu0
        %2321 = vdwg.mxu0
        %v2322 = vadd.f32 %v2161, %v2317
        %v2323 = vld [vmem:[%s19] sm:$0x1]
        %v2324 = vld [vmem:[%s20] sm:$0x1]
        %v2325 = vsel %vm700, %v2322, 0.0
        %2326 = vadd.xlane.f32.xlu0 %v2325
        %v2327 = vpop.xlane.xlu0 %2326
        %v2328 = vmul.f32 %v2327, %v704
        %v2329 = vsub.f32 %v2322, %v2328
        %v2330 = vmul.f32 %v2329, %v2329
        %v2331 = vsel %vm700, %v2330, 0.0
        %2332 = vadd.xlane.f32.xlu0 %v2331
        %v2333 = vpop.xlane.xlu0 %2332
        %v2334 = vmul.f32 %v2333, %v704
        %v2335 = vadd.f32 %v2334, 1e-12
        %v2336 = vrsqrt.pop %v2335
        %v2337 = vmul.f32 %v2329, %v2336
        %v2339 = vlaneseq
        %v2340 = vshrl.u32 %v2339, 7
        %v2341 = vsub.s32 0, %v2340
        %v2342 = vrot.slane %v2323, %v2341
        %v2344 = vmul.f32 %v2337, %v2342
        %v2346 = vlaneseq
        %v2347 = vshrl.u32 %v2346, 7
        %v2348 = vsub.s32 0, %v2347
        %v2349 = vrot.slane %v2324, %v2348
        %v2351 = vadd.f32 %v2344, %v2349
        %v2352 = vpack.c.bf16 %v2351, %v2351
        %v2353 = vld [vmem:[%s21] sm:$0xf]
        %v2354 = vld [vmem:[%s21 + $0x4] sm:$0xf]
        %v2355 = vld [vmem:[%s21 + $0x8] sm:$0xf]
        %v2356 = vld [vmem:[%s21 + $0xc] sm:$0xf]
        %v2357 = vld [vmem:[%s22] sm:$0x1]
        %v2359 = vlaneseq
        %v2360 = vshrl.u32 %v2359, 7
        %v2361 = vsub.s32 0, %v2360
        %v2362 = vrot.slane %v2357, %v2361
        %v2368 = vunpack.c.l.b16 %v2353
        %v2369 = vunpack.c.l.b16 %v2354
        %v2370 = vunpack.c.l.b16 %v2355
        %v2371 = vunpack.c.l.b16 %v2356
        %v2372 = vpack.c.b16 %v2369, %v2368
        %v2373 = vpack.c.b16 %v2371, %v2370
        %v2377 = vsel %vm700, %v2352, 0
        %2379 = vmatprep.subr.bf16.mxu0 0
        %2380 = vmatpush1.bf16.msra.mxu0 %v2372
        %2381 = vmatprep.subr.bf16.mxu0 0
        %2382 = vmatpush1.bf16.msra.mxu0 %v2373
        %2383 = vmatprep.subr.bf16.mxu0 0
        %2384 = vmatpush1.bf16.msra.mxu0 0
        %2385 = vmatprep.subr.bf16.mxu0 0
        %2386 = vmatpush1.bf16.msra.mxu0 0
        %2387 = vmatprep.subr.bf16.mxu0 0
        %2388 = vmatpush1.bf16.msra.mxu0 0
        %2389 = vmatprep.subr.bf16.mxu0 0
        %2390 = vmatpush1.bf16.msra.mxu0 0
        %2391 = vmatprep.subr.bf16.mxu0 0
        %2392 = vmatpush1.bf16.msra.mxu0 0
        %2393 = vmatprep.subr.bf16.mxu0 0
        %2394 = vmatpush1.bf16.msra.mxu0 0
        %2395 = vmatprep.subr.bf16.mxu0 0
        %2396 = vmatpush1.bf16.msra.mxu0 0
        %2397 = vmatprep.subr.bf16.mxu0 0
        %2398 = vmatpush1.bf16.msra.mxu0 0
        %2399 = vmatprep.subr.bf16.mxu0 0
        %2400 = vmatpush1.bf16.msra.mxu0 0
        %2401 = vmatprep.subr.bf16.mxu0 0
        %2402 = vmatpush1.bf16.msra.mxu0 0
        %2403 = vmatprep.subr.bf16.mxu0 0
        %2404 = vmatpush1.bf16.msra.mxu0 0
        %2405 = vmatprep.subr.bf16.mxu0 0
        %2406 = vmatpush1.bf16.msra.mxu0 0
        %2407 = vmatprep.subr.bf16.mxu0 0
        %2408 = vmatpush1.bf16.msra.mxu0 0
        %2409 = vmatprep.subr.bf16.mxu0 0
        %2410 = vmatpush1.bf16.msra.mxu0 0
        %2411 = vmatprep.mubr.bf16.mxu0 0
        %2412 = vmatmul.mubr.bf16.gmra.mrb[0].mxu0 %v2377
        %v2413 = vpop.f32.mrb[0].mxu0
        %v2414 = vadd.f32 %v2362, %v2413
        %v2415 = vpop.f32.mrb[0].mxu0
        %v2416 = vpop.f32.mrb[0].mxu0
        %v2417 = vpop.f32.mrb[0].mxu0
        %2418 = vdwg.mxu0
        %s2419 = smul.u32 %s38, 8
        %v2420 = vlaneseq
        %v2421 = vshrl.u32 %v2420, 7
        %v2422 = vstv %s2419
        %v2423 = vadd.s32 %v2421, %v2422
        %v2424 = vlaneseq
        %v2425 = vand.u32 %v2424, 127
        %s2426 = sld [smem:[#allocation3]]
        %v2427 = vmul.u32 %v2423, 16
        %v2428 = vadd.s32 %v2427, %v2425
        %s2429 = smul.u32 %s2426, 2654435769
        %v2430 = vstv %s2429
        %v2431 = vxor.u32 %v2428, %v2430
        %v2432 = vmul.u32 %v2431, 2246822507
        %v2433 = vshrl.u32 %v2432, 13
        %v2434 = vxor.u32 %v2432, %v2433
        %v2435 = vmul.u32 %v2434, 3266489909
        %v2436 = vshrl.u32 %v2435, 16
        %v2437 = vxor.u32 %v2435, %v2436
        %v2438 = vshrl.u32 %v2437, 8
        %v2439 = vshrl.u32 %v2438, 16
        %v2440 = vand.u32 %v2438, 65535
        %v2441 = vcvt.s32.f32 %v2439
        %v2442 = vmul.f32 %v2441, 65536.0
        %v2443 = vcvt.s32.f32 %v2440
        %v2444 = vadd.f32 %v2442, %v2443
        %v2445 = vmul.f32 %v2444, 5.9604645e-08
        %vm2446 = vcmp.ge.f32.partialorder %v2445, 0.2
        %v2447 = vmul.f32 %v2414, 1.25
        %v2448 = vsel %vm2446, %v2447, 0.0
        %vm2449 = vcmask 130048
        %2450 = vst.msk [vmem:[%s687] sm:$0xff] %vm2449, %v2448
        %s2451 = sand.u32 %s518, 1
        %s2452 = scalar_lea.sflag [#allocation5], %s2451
        %s2453 = sand.u32 %s518, 1
        %s2454 = smul.addr %s2453, 8
        %s2455 = scalar_lea.vmem [#allocation4], %s2454
        // Predicated region
        $region109: #{tpu_custom_call.1} parent=107 // pred_check
          %p2456 = pneg %p528
        $region110: #{tpu_custom_call.1} parent=107 // pred_check_branch
          %2458 = sbr.rel (%p2456) target = $region112
        $region111: #{tpu_custom_call.1} parent=107 // pred_region
          %s2460 = ssub.s32 128, 128
          %2461 = vsyncadd %s2452, %s2460
          %s2462 = smul.addr %s38, 128
          %s2463 = scalar_lea.hbm %s23, %s2462
          %s2465 = sshll.u32 %s2455, 4
          %s2466 = int_to_ptr.vmem [resolvable:$true] %s2465
          %2468 = dma.vmem_to_hbm [thread:$0]  %s2466, 128, %s2463, %s2452
        $region112: #{tpu_custom_call.1} parent=107 // pred_fallthru
          _
      $region108: #{tpu_custom_call.1} parent=5 // pred_fallthru
        _
      %p2469 = scmp.le.s32.totalorder 2, %s33
      // Predicated region
      $region113: #{tpu_custom_call.1} parent=5 // pred_check
        %p2470 = pneg %p2469
      $region114: #{tpu_custom_call.1} parent=5 // pred_check_branch
        %2472 = sbr.rel (%p2470) target = $region116
      $region115: #{tpu_custom_call.1} parent=5 // pred_region
        %s2473 = ssub.s32 %s33, 2
        // Predicated region
        $region117: #{tpu_custom_call.1} parent=115 // pred_check
          %p2474 = pneg %p534
        $region118: #{tpu_custom_call.1} parent=115 // pred_check_branch
          %2476 = sbr.rel (%p2474) target = $region120
        $region119: #{tpu_custom_call.1} parent=115 // pred_region
          %s2477 = sand.u32 %s519, 1
          %s2478 = scalar_lea.sflag [#allocation5], %s2477
          %s2479 = sand.u32 %s519, 1
          %s2480 = smul.addr %s2479, 8
          %s2481 = scalar_lea.vmem [#allocation4], %s2480
          %2482 = dma.done %s2478, 128
        $region120: #{tpu_custom_call.1} parent=115 // pred_fallthru
          _
      $region116: #{tpu_custom_call.1} parent=5 // pred_fallthru
        _
    $region6: #{tpu_custom_call.1} parent=1 // loop_footer
      %s37 = sadd.s32 1, %s33
    $region7: #{tpu_custom_call.1} parent=1 // loop_footer_branch
      %32 = sbr.rel target = $region3
    $region8: #{tpu_custom_call.1} parent=1 // loop_exit
      _
    %2483 = vsyncpa [#allocation5], 1
    %s2484 = scalar_lea.sflag [#allocation5], 1
    %2485 = vsyncpa %s2484, 1

</llo_original>
